<compile_context>
chip_gen: v5e
topology: v5e:2x2
jax: 0.10.0
libtpu: 0.0.40
codegen_flags: <defaults>
</compile_context>

<pallas_src>
import functools

import jax
import jax.numpy as jnp
from jax import lax
from jax.experimental import pallas as pl
from jax.experimental.pallas import tpu as pltpu


def cbam_kernel(x_ref, w1_ref, b1_ref, w2_ref, b2_ref, wm_ref, out_ref, *, H, W, Bt):
    # x_ref: [Bt, C, H*W] block (lane-dense layout), wm_ref: [49, 2*Bt, H*W] folded weights.
    HW = H * W
    xb = x_ref[...].astype(jnp.float32)                     # [Bt, C, HW]
    C = xb.shape[1]

    # ---------------- CAM (channel attention) ----------------
    # Fused MLP RHS: columns are (max_0, avg_0, max_1, avg_1, ...) -> [C, 2*Bt].
    pooled_cols = []
    for b in range(Bt):
        xbb = xb[b]                                          # [C, HW]
        pooled_cols.append(jnp.max(xbb, axis=1, keepdims=True))
        pooled_cols.append(jnp.sum(xbb, axis=1, keepdims=True) * (1.0 / HW))
    pooled = jnp.concatenate(pooled_cols, axis=1)            # [C, 2*Bt]

    h = jnp.maximum(
        jnp.dot(w1_ref[...], pooled, preferred_element_type=jnp.float32) + b1_ref[...],
        0.0)                                                 # [Cr, 2*Bt]
    o = jnp.dot(w2_ref[...], h, preferred_element_type=jnp.float32) + b2_ref[...]  # [C, 2*Bt]

    cams = []
    plane_rows_max = []
    plane_rows_avg = []
    for b in range(Bt):
        # per-column MLP is linear+relu column-wise, so mlp(max)+mlp(avg) == o[:,2b]+o[:,2b+1]
        att = jax.nn.sigmoid(o[:, 2 * b:2 * b + 1] + o[:, 2 * b + 1:2 * b + 2])   # [C, 1]
        cam_b = xb[b] * att                                  # [C, HW]
        cams.append(cam_b)
        plane_rows_max.append(jnp.max(cam_b, axis=0, keepdims=True))              # [1, HW]
        plane_rows_avg.append(jnp.sum(cam_b, axis=0, keepdims=True) * (1.0 / C))  # [1, HW]

    # ---------------- SAM (spatial attention) ----------------
    # Stacked planes: rows [0:Bt] = per-batch max plane, rows [Bt:2Bt] = per-batch avg plane.
    planes = jnp.concatenate(plane_rows_max + plane_rows_avg, axis=0)   # [2*Bt, HW]

    # 7x7 "same" conv (in=2, out=1, no bias): 49 lane rolls of the plane stack.
    # Zero padding + per-channel weight are pre-folded into wm_ref (built in the wrapper).
    acc0 = jnp.zeros((2 * Bt, HW), jnp.float32)
    acc1 = jnp.zeros((2 * Bt, HW), jnp.float32)
    accs = [acc0, acc1]
    for t in range(49):
        ky, kx = t // 7, t % 7
        dy, dx = ky - 3, kx - 3
        shift = (HW - (dy * W + dx)) % HW                    # rolled[i] = planes[:, i + dy*W + dx]
        rolled = planes if shift == 0 else pltpu.roll(planes, shift, axis=1)
        accs[t & 1] = accs[t & 1] + wm_ref[t] * rolled
    acc = accs[0] + accs[1]                                  # [2*Bt, HW]
    conv = acc[:Bt] + acc[Bt:]                               # [Bt, HW]  (max-plane + avg-plane)
    sig = jax.nn.sigmoid(conv)                               # [Bt, HW]

    for b in range(Bt):
        out_ref[b] = (sig[b:b + 1] * cams[b] + xb[b]).astype(out_ref.dtype)


def _pick_bt(B):
    # Largest batch tile in {4, 2, 1} that still leaves >= 2 "parallel" grid programs
    # (v7x has 2 TensorCores); 2*Bt = sublane rows used by the SAM conv tap loop.
    for bt in (4, 2, 1):
        if B % bt == 0 and B // bt >= 2:
            return bt
    for bt in (4, 2, 1):
        if B % bt == 0:
            return bt
    return 1


def _build_wm_table(wconv, H, W, bt):
    # wm[t, i, :]: conv weight for tap t (= ky*7+kx) folded with the zero-pad validity mask,
    # replicated over the bt stacked batch rows.  Rows [0:bt] use the "max" channel weight
    # (torch.cat order: channel 0 = max, channel 1 = avg), rows [bt:2bt] the "avg" weight.
    HW = H * W
    flat = jnp.arange(HW, dtype=jnp.int32)
    row = flat // W
    col = flat % W
    rows = []
    for t in range(49):
        ky, kx = t // 7, t % 7
        dy, dx = ky - 3, kx - 3
        valid = ((row + dy >= 0) & (row + dy < H) &
                 (col + dx >= 0) & (col + dx < W)).astype(jnp.float32)       # [HW]
        w_max = wconv[0, 0, ky, kx]
        w_avg = wconv[0, 1, ky, kx]
        rows.append(jnp.concatenate([
            jnp.broadcast_to(w_max * valid, (bt, HW)),
            jnp.broadcast_to(w_avg * valid, (bt, HW))], axis=0))             # [2*bt, HW]
    return jnp.stack(rows, axis=0)                                           # [49, 2*bt, HW]


def cbam_forward(x, w1, b1, w2, b2, wconv, *, bt=None):
    B, C, H, W = x.shape
    HW = H * W
    Cr = w1.shape[0]
    if bt is None:
        bt = _pick_bt(B)
    assert B % bt == 0

    x_f = x.reshape(B, C, HW)                                # lane-dense view (free XLA reshape)
    w1c = w1.astype(jnp.float32)                             # [Cr, C]  (torch Linear [out, in])
    w2c = w2.astype(jnp.float32)                             # [C, Cr]
    b1c = b1.reshape(Cr, 1).astype(jnp.float32)
    b2c = b2.reshape(C, 1).astype(jnp.float32)
    wm = _build_wm_table(wconv.astype(jnp.float32), H, W, bt)   # [49, 2*bt, HW]

    kernel = functools.partial(cbam_kernel, H=H, W=W, Bt=bt)

    out_f = pl.pallas_call(
        kernel,
        out_shape=jax.ShapeDtypeStruct((B, C, HW), x.dtype),
        grid=(B // bt,),
        in_specs=[
            pl.BlockSpec((bt, C, HW), lambda i: (i, 0, 0)),
            pl.BlockSpec((Cr, C), lambda i: (0, 0)),
            pl.BlockSpec((Cr, 1), lambda i: (0, 0)),
            pl.BlockSpec((C, Cr), lambda i: (0, 0)),
            pl.BlockSpec((C, 1), lambda i: (0, 0)),
            pl.BlockSpec((49, 2 * bt, HW), lambda i: (0, 0, 0)),
        ],
        out_specs=pl.BlockSpec((bt, C, HW), lambda i: (i, 0, 0)),
        compiler_params=pltpu.CompilerParams(dimension_semantics=("parallel",)),
    )(x_f, w1c, b1c, w2c, b2c, wm)
    return out_f.reshape(B, C, H, W)


def cbam_reference(x, w1, b1, w2, b2, wconv):
    # Pure-JAX reference mirroring the PyTorch forward (for correctness check).
    mx = jnp.max(x, axis=(2, 3))
    av = jnp.mean(x, axis=(2, 3))

    def mlp(p):  # p: [B, C]
        return jnp.maximum(p @ w1.T + b1, 0.0) @ w2.T + b2

    att = jax.nn.sigmoid(mlp(mx) + mlp(av))[:, :, None, None]
    cam = att * x

    cmax = jnp.max(cam, axis=1, keepdims=True)
    cavg = jnp.mean(cam, axis=1, keepdims=True)
    concat = jnp.concatenate([cmax, cavg], axis=1)           # [B, 2, H, W]
    conv = lax.conv_general_dilated(
        concat, wconv, window_strides=(1, 1), padding=((3, 3), (3, 3)),
        dimension_numbers=("NCHW", "OIHW", "NCHW"))
    sam = jax.nn.sigmoid(conv) * cam
    return sam + x


if __name__ == "__main__":
    B, C, H, W = 4, 8, 16, 16
    r = 2
    Cr = C // r

    key = jax.random.PRNGKey(0)
    kx, k1, k2, k3, k4, k5 = jax.random.split(key, 6)

    x = jax.random.normal(kx, (B, C, H, W), dtype=jnp.float32)

    # deterministic synthetic parameters (torch Linear weights are [out, in])
    w1 = 0.1 * jax.random.normal(k1, (Cr, C), dtype=jnp.float32)
    b1 = 0.1 * jax.random.normal(k2, (Cr,), dtype=jnp.float32)
    w2 = 0.1 * jax.random.normal(k3, (C, Cr), dtype=jnp.float32)
    b2 = 0.1 * jax.random.normal(k4, (C,), dtype=jnp.float32)
    # Conv2d(2 -> 1, kernel=7, bias=False) weight: [1, 2, 7, 7]
    wconv = 0.1 * jax.random.normal(k5, (1, 2, 7, 7), dtype=jnp.float32)

    out = cbam_forward(x, w1, b1, w2, b2, wconv)
    out = jax.block_until_ready(out)

    ref = jax.block_until_ready(cbam_reference(x, w1, b1, w2, b2, wconv))
    assert out.shape == (B, C, H, W)
    assert jnp.allclose(out, ref, atol=1e-4, rtol=1e-4), (
        f"max abs diff: {jnp.max(jnp.abs(out - ref))}")

    print("KERNEL_OK")
</pallas_src>

<mosaic_0001>
module attributes {stable_mosaic.version = 11 : i64} {
  func.func @cbam_kernel(%arg0: i32, %arg1: memref<2x8x256xf32, #tpu.memory_space<vmem>>, %arg2: memref<4x8xf32, #tpu.memory_space<vmem>>, %arg3: memref<4x1xf32, #tpu.memory_space<vmem>>, %arg4: memref<8x4xf32, #tpu.memory_space<vmem>>, %arg5: memref<8x1xf32, #tpu.memory_space<vmem>>, %arg6: memref<49x4x256xf32, #tpu.memory_space<vmem>>, %arg7: memref<2x8x256xf32, #tpu.memory_space<vmem>>) attributes {dimension_semantics = [#tpu.dimension_semantics<parallel>], iteration_bounds = array<i64: 2>, scalar_prefetch = 0 : i64, scratch_operands = 0 : i64, tpu.core_type = #tpu.core_type<tc>, window_params = [{transform_indices = @transform_0, window_bounds = array<i64: 2, 8, 256>}, {pipeline_mode = #tpu.pipeline_mode<synchronous>, transform_indices = @transform_1, window_bounds = array<i64: 4, 8>}, {pipeline_mode = #tpu.pipeline_mode<synchronous>, transform_indices = @transform_2, window_bounds = array<i64: 4, 1>}, {pipeline_mode = #tpu.pipeline_mode<synchronous>, transform_indices = @transform_3, window_bounds = array<i64: 8, 4>}, {pipeline_mode = #tpu.pipeline_mode<synchronous>, transform_indices = @transform_4, window_bounds = array<i64: 8, 1>}, {pipeline_mode = #tpu.pipeline_mode<synchronous>, transform_indices = @transform_5, window_bounds = array<i64: 49, 4, 256>}, {transform_indices = @transform_6, window_bounds = array<i64: 2, 8, 256>}]} {
    %c0 = arith.constant 0 : index
    %c0_0 = arith.constant 0 : index
    %c0_1 = arith.constant 0 : index
    %0 = vector.load %arg1[%c0, %c0_0, %c0_1] : memref<2x8x256xf32, #tpu.memory_space<vmem>>, vector<2x8x256xf32>
    %1 = vector.extract_strided_slice %0 {offsets = [0, 0, 0], sizes = [1, 8, 256], strides = [1, 1, 1]} : vector<2x8x256xf32> to vector<1x8x256xf32>
    %2 = vector.shape_cast %1 : vector<1x8x256xf32> to vector<8x256xf32>
    %cst = arith.constant dense<0xFF800000> : vector<8xf32>
    %3 = vector.multi_reduction <maximumf>, %2, %cst [1] : vector<8x256xf32> to vector<8xf32>
    %4 = vector.shape_cast %3 : vector<8xf32> to vector<8x1xf32>
    %cst_2 = arith.constant dense<0.000000e+00> : vector<8xf32>
    %5 = vector.multi_reduction <add>, %2, %cst_2 [1] : vector<8x256xf32> to vector<8xf32>
    %6 = vector.shape_cast %5 : vector<8xf32> to vector<8x1xf32>
    %cst_3 = arith.constant 3.906250e-03 : f32
    %7 = vector.broadcast %cst_3 : f32 to vector<8x1xf32>
    %8 = arith.mulf %6, %7 : vector<8x1xf32>
    %9 = vector.extract_strided_slice %0 {offsets = [1, 0, 0], sizes = [1, 8, 256], strides = [1, 1, 1]} : vector<2x8x256xf32> to vector<1x8x256xf32>
    %10 = vector.shape_cast %9 : vector<1x8x256xf32> to vector<8x256xf32>
    %cst_4 = arith.constant dense<0xFF800000> : vector<8xf32>
    %11 = vector.multi_reduction <maximumf>, %10, %cst_4 [1] : vector<8x256xf32> to vector<8xf32>
    %12 = vector.shape_cast %11 : vector<8xf32> to vector<8x1xf32>
    %cst_5 = arith.constant dense<0.000000e+00> : vector<8xf32>
    %13 = vector.multi_reduction <add>, %10, %cst_5 [1] : vector<8x256xf32> to vector<8xf32>
    %14 = vector.shape_cast %13 : vector<8xf32> to vector<8x1xf32>
    %cst_6 = arith.constant 3.906250e-03 : f32
    %15 = vector.broadcast %cst_6 : f32 to vector<8x1xf32>
    %16 = arith.mulf %14, %15 : vector<8x1xf32>
    %17 = tpu.concatenate %4, %8, %12, %16 in 1 : vector<8x1xf32>, vector<8x1xf32>, vector<8x1xf32>, vector<8x1xf32> -> vector<8x4xf32>
    %c0_7 = arith.constant 0 : index
    %c0_8 = arith.constant 0 : index
    %18 = vector.load %arg2[%c0_7, %c0_8] : memref<4x8xf32, #tpu.memory_space<vmem>>, vector<4x8xf32>
    %cst_9 = arith.constant dense<0.000000e+00> : vector<4x4xf32>
    %19 = tpu.matmul %18, %17, %cst_9 {dimension_numbers = #tpu.dot_dimension_numbers<[1], [0], [0], [1], [0, 0, 1, 1], [], []>} : vector<4x8xf32>, vector<8x4xf32>, vector<4x4xf32> -> vector<4x4xf32>
    %c0_10 = arith.constant 0 : index
    %c0_11 = arith.constant 0 : index
    %20 = vector.load %arg3[%c0_10, %c0_11] : memref<4x1xf32, #tpu.memory_space<vmem>>, vector<4x1xf32>
    %21 = vector.broadcast %20 : vector<4x1xf32> to vector<4x4xf32>
    %22 = arith.addf %19, %21 : vector<4x4xf32>
    %cst_12 = arith.constant 0.000000e+00 : f32
    %23 = vector.broadcast %cst_12 : f32 to vector<4x4xf32>
    %24 = arith.maximumf %22, %23 : vector<4x4xf32>
    %c0_13 = arith.constant 0 : index
    %c0_14 = arith.constant 0 : index
    %25 = vector.load %arg4[%c0_13, %c0_14] : memref<8x4xf32, #tpu.memory_space<vmem>>, vector<8x4xf32>
    %cst_15 = arith.constant dense<0.000000e+00> : vector<8x4xf32>
    %26 = tpu.matmul %25, %24, %cst_15 {dimension_numbers = #tpu.dot_dimension_numbers<[1], [0], [0], [1], [0, 0, 1, 1], [], []>} : vector<8x4xf32>, vector<4x4xf32>, vector<8x4xf32> -> vector<8x4xf32>
    %c0_16 = arith.constant 0 : index
    %c0_17 = arith.constant 0 : index
    %27 = vector.load %arg5[%c0_16, %c0_17] : memref<8x1xf32, #tpu.memory_space<vmem>>, vector<8x1xf32>
    %28 = vector.broadcast %27 : vector<8x1xf32> to vector<8x4xf32>
    %29 = arith.addf %26, %28 : vector<8x4xf32>
    %30 = vector.extract_strided_slice %29 {offsets = [0, 0], sizes = [8, 1], strides = [1, 1]} : vector<8x4xf32> to vector<8x1xf32>
    %31 = vector.extract_strided_slice %29 {offsets = [0, 1], sizes = [8, 1], strides = [1, 1]} : vector<8x4xf32> to vector<8x1xf32>
    %32 = arith.addf %30, %31 : vector<8x1xf32>
    %33 = arith.negf %32 : vector<8x1xf32>
    %34 = math.exp %33 : vector<8x1xf32>
    %cst_18 = arith.constant 1.000000e+00 : f32
    %35 = vector.broadcast %cst_18 : f32 to vector<8x1xf32>
    %36 = arith.addf %35, %34 : vector<8x1xf32>
    %37 = arith.divf %35, %36 : vector<8x1xf32>
    %38 = vector.extract_strided_slice %0 {offsets = [0, 0, 0], sizes = [1, 8, 256], strides = [1, 1, 1]} : vector<2x8x256xf32> to vector<1x8x256xf32>
    %39 = vector.shape_cast %38 : vector<1x8x256xf32> to vector<8x256xf32>
    %40 = vector.broadcast %37 : vector<8x1xf32> to vector<8x256xf32>
    %41 = arith.mulf %39, %40 : vector<8x256xf32>
    %cst_19 = arith.constant dense<0xFF800000> : vector<256xf32>
    %42 = vector.multi_reduction <maximumf>, %41, %cst_19 [0] : vector<8x256xf32> to vector<256xf32>
    %43 = vector.shape_cast %42 : vector<256xf32> to vector<1x256xf32>
    %cst_20 = arith.constant dense<0.000000e+00> : vector<256xf32>
    %44 = vector.multi_reduction <add>, %41, %cst_20 [0] : vector<8x256xf32> to vector<256xf32>
    %45 = vector.shape_cast %44 : vector<256xf32> to vector<1x256xf32>
    %cst_21 = arith.constant 1.250000e-01 : f32
    %46 = vector.broadcast %cst_21 : f32 to vector<1x256xf32>
    %47 = arith.mulf %45, %46 : vector<1x256xf32>
    %48 = vector.extract_strided_slice %29 {offsets = [0, 2], sizes = [8, 1], strides = [1, 1]} : vector<8x4xf32> to vector<8x1xf32>
    %49 = vector.extract_strided_slice %29 {offsets = [0, 3], sizes = [8, 1], strides = [1, 1]} : vector<8x4xf32> to vector<8x1xf32>
    %50 = arith.addf %48, %49 : vector<8x1xf32>
    %51 = arith.negf %50 : vector<8x1xf32>
    %52 = math.exp %51 : vector<8x1xf32>
    %cst_22 = arith.constant 1.000000e+00 : f32
    %53 = vector.broadcast %cst_22 : f32 to vector<8x1xf32>
    %54 = arith.addf %53, %52 : vector<8x1xf32>
    %55 = arith.divf %53, %54 : vector<8x1xf32>
    %56 = vector.extract_strided_slice %0 {offsets = [1, 0, 0], sizes = [1, 8, 256], strides = [1, 1, 1]} : vector<2x8x256xf32> to vector<1x8x256xf32>
    %57 = vector.shape_cast %56 : vector<1x8x256xf32> to vector<8x256xf32>
    %58 = vector.broadcast %55 : vector<8x1xf32> to vector<8x256xf32>
    %59 = arith.mulf %57, %58 : vector<8x256xf32>
    %cst_23 = arith.constant dense<0xFF800000> : vector<256xf32>
    %60 = vector.multi_reduction <maximumf>, %59, %cst_23 [0] : vector<8x256xf32> to vector<256xf32>
    %61 = vector.shape_cast %60 : vector<256xf32> to vector<1x256xf32>
    %cst_24 = arith.constant dense<0.000000e+00> : vector<256xf32>
    %62 = vector.multi_reduction <add>, %59, %cst_24 [0] : vector<8x256xf32> to vector<256xf32>
    %63 = vector.shape_cast %62 : vector<256xf32> to vector<1x256xf32>
    %cst_25 = arith.constant 1.250000e-01 : f32
    %64 = vector.broadcast %cst_25 : f32 to vector<1x256xf32>
    %65 = arith.mulf %63, %64 : vector<1x256xf32>
    %66 = tpu.concatenate %43, %61, %47, %65 in 0 : vector<1x256xf32>, vector<1x256xf32>, vector<1x256xf32>, vector<1x256xf32> -> vector<4x256xf32>
    %cst_26 = arith.constant 0.000000e+00 : f32
    %67 = vector.broadcast %cst_26 : f32 to vector<4x256xf32>
    %cst_27 = arith.constant 0.000000e+00 : f32
    %68 = vector.broadcast %cst_27 : f32 to vector<4x256xf32>
    %c51_i32 = arith.constant 51 : i32
    %69 = tpu.dynamic_rotate %66 by %c51_i32 dim 1 : vector<4x256xf32>, i32 -> vector<4x256xf32>
    %c0_28 = arith.constant 0 : index
    %c0_29 = arith.constant 0 : index
    %c0_30 = arith.constant 0 : index
    %70 = vector.load %arg6[%c0_28, %c0_29, %c0_30] : memref<49x4x256xf32, #tpu.memory_space<vmem>>, vector<1x4x256xf32>
    %71 = vector.shape_cast %70 : vector<1x4x256xf32> to vector<4x256xf32>
    %72 = arith.mulf %71, %69 : vector<4x256xf32>
    %73 = arith.addf %67, %72 : vector<4x256xf32>
    %c50_i32 = arith.constant 50 : i32
    %74 = tpu.dynamic_rotate %66 by %c50_i32 dim 1 : vector<4x256xf32>, i32 -> vector<4x256xf32>
    %c1 = arith.constant 1 : index
    %c0_31 = arith.constant 0 : index
    %c0_32 = arith.constant 0 : index
    %75 = vector.load %arg6[%c1, %c0_31, %c0_32] : memref<49x4x256xf32, #tpu.memory_space<vmem>>, vector<1x4x256xf32>
    %76 = vector.shape_cast %75 : vector<1x4x256xf32> to vector<4x256xf32>
    %77 = arith.mulf %76, %74 : vector<4x256xf32>
    %78 = arith.addf %68, %77 : vector<4x256xf32>
    %c49_i32 = arith.constant 49 : i32
    %79 = tpu.dynamic_rotate %66 by %c49_i32 dim 1 : vector<4x256xf32>, i32 -> vector<4x256xf32>
    %c2 = arith.constant 2 : index
    %c0_33 = arith.constant 0 : index
    %c0_34 = arith.constant 0 : index
    %80 = vector.load %arg6[%c2, %c0_33, %c0_34] : memref<49x4x256xf32, #tpu.memory_space<vmem>>, vector<1x4x256xf32>
    %81 = vector.shape_cast %80 : vector<1x4x256xf32> to vector<4x256xf32>
    %82 = arith.mulf %81, %79 : vector<4x256xf32>
    %83 = arith.addf %73, %82 : vector<4x256xf32>
    %c48_i32 = arith.constant 48 : i32
    %84 = tpu.dynamic_rotate %66 by %c48_i32 dim 1 : vector<4x256xf32>, i32 -> vector<4x256xf32>
    %c3 = arith.constant 3 : index
    %c0_35 = arith.constant 0 : index
    %c0_36 = arith.constant 0 : index
    %85 = vector.load %arg6[%c3, %c0_35, %c0_36] : memref<49x4x256xf32, #tpu.memory_space<vmem>>, vector<1x4x256xf32>
    %86 = vector.shape_cast %85 : vector<1x4x256xf32> to vector<4x256xf32>
    %87 = arith.mulf %86, %84 : vector<4x256xf32>
    %88 = arith.addf %78, %87 : vector<4x256xf32>
    %c47_i32 = arith.constant 47 : i32
    %89 = tpu.dynamic_rotate %66 by %c47_i32 dim 1 : vector<4x256xf32>, i32 -> vector<4x256xf32>
    %c4 = arith.constant 4 : index
    %c0_37 = arith.constant 0 : index
    %c0_38 = arith.constant 0 : index
    %90 = vector.load %arg6[%c4, %c0_37, %c0_38] : memref<49x4x256xf32, #tpu.memory_space<vmem>>, vector<1x4x256xf32>
    %91 = vector.shape_cast %90 : vector<1x4x256xf32> to vector<4x256xf32>
    %92 = arith.mulf %91, %89 : vector<4x256xf32>
    %93 = arith.addf %83, %92 : vector<4x256xf32>
    %c46_i32 = arith.constant 46 : i32
    %94 = tpu.dynamic_rotate %66 by %c46_i32 dim 1 : vector<4x256xf32>, i32 -> vector<4x256xf32>
    %c5 = arith.constant 5 : index
    %c0_39 = arith.constant 0 : index
    %c0_40 = arith.constant 0 : index
    %95 = vector.load %arg6[%c5, %c0_39, %c0_40] : memref<49x4x256xf32, #tpu.memory_space<vmem>>, vector<1x4x256xf32>
    %96 = vector.shape_cast %95 : vector<1x4x256xf32> to vector<4x256xf32>
    %97 = arith.mulf %96, %94 : vector<4x256xf32>
    %98 = arith.addf %88, %97 : vector<4x256xf32>
    %c45_i32 = arith.constant 45 : i32
    %99 = tpu.dynamic_rotate %66 by %c45_i32 dim 1 : vector<4x256xf32>, i32 -> vector<4x256xf32>
    %c6 = arith.constant 6 : index
    %c0_41 = arith.constant 0 : index
    %c0_42 = arith.constant 0 : index
    %100 = vector.load %arg6[%c6, %c0_41, %c0_42] : memref<49x4x256xf32, #tpu.memory_space<vmem>>, vector<1x4x256xf32>
    %101 = vector.shape_cast %100 : vector<1x4x256xf32> to vector<4x256xf32>
    %102 = arith.mulf %101, %99 : vector<4x256xf32>
    %103 = arith.addf %93, %102 : vector<4x256xf32>
    %c35_i32 = arith.constant 35 : i32
    %104 = tpu.dynamic_rotate %66 by %c35_i32 dim 1 : vector<4x256xf32>, i32 -> vector<4x256xf32>
    %c7 = arith.constant 7 : index
    %c0_43 = arith.constant 0 : index
    %c0_44 = arith.constant 0 : index
    %105 = vector.load %arg6[%c7, %c0_43, %c0_44] : memref<49x4x256xf32, #tpu.memory_space<vmem>>, vector<1x4x256xf32>
    %106 = vector.shape_cast %105 : vector<1x4x256xf32> to vector<4x256xf32>
    %107 = arith.mulf %106, %104 : vector<4x256xf32>
    %108 = arith.addf %98, %107 : vector<4x256xf32>
    %c34_i32 = arith.constant 34 : i32
    %109 = tpu.dynamic_rotate %66 by %c34_i32 dim 1 : vector<4x256xf32>, i32 -> vector<4x256xf32>
    %c8 = arith.constant 8 : index
    %c0_45 = arith.constant 0 : index
    %c0_46 = arith.constant 0 : index
    %110 = vector.load %arg6[%c8, %c0_45, %c0_46] : memref<49x4x256xf32, #tpu.memory_space<vmem>>, vector<1x4x256xf32>
    %111 = vector.shape_cast %110 : vector<1x4x256xf32> to vector<4x256xf32>
    %112 = arith.mulf %111, %109 : vector<4x256xf32>
    %113 = arith.addf %103, %112 : vector<4x256xf32>
    %c33_i32 = arith.constant 33 : i32
    %114 = tpu.dynamic_rotate %66 by %c33_i32 dim 1 : vector<4x256xf32>, i32 -> vector<4x256xf32>
    %c9 = arith.constant 9 : index
    %c0_47 = arith.constant 0 : index
    %c0_48 = arith.constant 0 : index
    %115 = vector.load %arg6[%c9, %c0_47, %c0_48] : memref<49x4x256xf32, #tpu.memory_space<vmem>>, vector<1x4x256xf32>
    %116 = vector.shape_cast %115 : vector<1x4x256xf32> to vector<4x256xf32>
    %117 = arith.mulf %116, %114 : vector<4x256xf32>
    %118 = arith.addf %108, %117 : vector<4x256xf32>
    %c32_i32 = arith.constant 32 : i32
    %119 = tpu.dynamic_rotate %66 by %c32_i32 dim 1 : vector<4x256xf32>, i32 -> vector<4x256xf32>
    %c10 = arith.constant 10 : index
    %c0_49 = arith.constant 0 : index
    %c0_50 = arith.constant 0 : index
    %120 = vector.load %arg6[%c10, %c0_49, %c0_50] : memref<49x4x256xf32, #tpu.memory_space<vmem>>, vector<1x4x256xf32>
    %121 = vector.shape_cast %120 : vector<1x4x256xf32> to vector<4x256xf32>
    %122 = arith.mulf %121, %119 : vector<4x256xf32>
    %123 = arith.addf %113, %122 : vector<4x256xf32>
    %c31_i32 = arith.constant 31 : i32
    %124 = tpu.dynamic_rotate %66 by %c31_i32 dim 1 : vector<4x256xf32>, i32 -> vector<4x256xf32>
    %c11 = arith.constant 11 : index
    %c0_51 = arith.constant 0 : index
    %c0_52 = arith.constant 0 : index
    %125 = vector.load %arg6[%c11, %c0_51, %c0_52] : memref<49x4x256xf32, #tpu.memory_space<vmem>>, vector<1x4x256xf32>
    %126 = vector.shape_cast %125 : vector<1x4x256xf32> to vector<4x256xf32>
    %127 = arith.mulf %126, %124 : vector<4x256xf32>
    %128 = arith.addf %118, %127 : vector<4x256xf32>
    %c30_i32 = arith.constant 30 : i32
    %129 = tpu.dynamic_rotate %66 by %c30_i32 dim 1 : vector<4x256xf32>, i32 -> vector<4x256xf32>
    %c12 = arith.constant 12 : index
    %c0_53 = arith.constant 0 : index
    %c0_54 = arith.constant 0 : index
    %130 = vector.load %arg6[%c12, %c0_53, %c0_54] : memref<49x4x256xf32, #tpu.memory_space<vmem>>, vector<1x4x256xf32>
    %131 = vector.shape_cast %130 : vector<1x4x256xf32> to vector<4x256xf32>
    %132 = arith.mulf %131, %129 : vector<4x256xf32>
    %133 = arith.addf %123, %132 : vector<4x256xf32>
    %c29_i32 = arith.constant 29 : i32
    %134 = tpu.dynamic_rotate %66 by %c29_i32 dim 1 : vector<4x256xf32>, i32 -> vector<4x256xf32>
    %c13 = arith.constant 13 : index
    %c0_55 = arith.constant 0 : index
    %c0_56 = arith.constant 0 : index
    %135 = vector.load %arg6[%c13, %c0_55, %c0_56] : memref<49x4x256xf32, #tpu.memory_space<vmem>>, vector<1x4x256xf32>
    %136 = vector.shape_cast %135 : vector<1x4x256xf32> to vector<4x256xf32>
    %137 = arith.mulf %136, %134 : vector<4x256xf32>
    %138 = arith.addf %128, %137 : vector<4x256xf32>
    %c19_i32 = arith.constant 19 : i32
    %139 = tpu.dynamic_rotate %66 by %c19_i32 dim 1 : vector<4x256xf32>, i32 -> vector<4x256xf32>
    %c14 = arith.constant 14 : index
    %c0_57 = arith.constant 0 : index
    %c0_58 = arith.constant 0 : index
    %140 = vector.load %arg6[%c14, %c0_57, %c0_58] : memref<49x4x256xf32, #tpu.memory_space<vmem>>, vector<1x4x256xf32>
    %141 = vector.shape_cast %140 : vector<1x4x256xf32> to vector<4x256xf32>
    %142 = arith.mulf %141, %139 : vector<4x256xf32>
    %143 = arith.addf %133, %142 : vector<4x256xf32>
    %c18_i32 = arith.constant 18 : i32
    %144 = tpu.dynamic_rotate %66 by %c18_i32 dim 1 : vector<4x256xf32>, i32 -> vector<4x256xf32>
    %c15 = arith.constant 15 : index
    %c0_59 = arith.constant 0 : index
    %c0_60 = arith.constant 0 : index
    %145 = vector.load %arg6[%c15, %c0_59, %c0_60] : memref<49x4x256xf32, #tpu.memory_space<vmem>>, vector<1x4x256xf32>
    %146 = vector.shape_cast %145 : vector<1x4x256xf32> to vector<4x256xf32>
    %147 = arith.mulf %146, %144 : vector<4x256xf32>
    %148 = arith.addf %138, %147 : vector<4x256xf32>
    %c17_i32 = arith.constant 17 : i32
    %149 = tpu.dynamic_rotate %66 by %c17_i32 dim 1 : vector<4x256xf32>, i32 -> vector<4x256xf32>
    %c16 = arith.constant 16 : index
    %c0_61 = arith.constant 0 : index
    %c0_62 = arith.constant 0 : index
    %150 = vector.load %arg6[%c16, %c0_61, %c0_62] : memref<49x4x256xf32, #tpu.memory_space<vmem>>, vector<1x4x256xf32>
    %151 = vector.shape_cast %150 : vector<1x4x256xf32> to vector<4x256xf32>
    %152 = arith.mulf %151, %149 : vector<4x256xf32>
    %153 = arith.addf %143, %152 : vector<4x256xf32>
    %c16_i32 = arith.constant 16 : i32
    %154 = tpu.dynamic_rotate %66 by %c16_i32 dim 1 : vector<4x256xf32>, i32 -> vector<4x256xf32>
    %c17 = arith.constant 17 : index
    %c0_63 = arith.constant 0 : index
    %c0_64 = arith.constant 0 : index
    %155 = vector.load %arg6[%c17, %c0_63, %c0_64] : memref<49x4x256xf32, #tpu.memory_space<vmem>>, vector<1x4x256xf32>
    %156 = vector.shape_cast %155 : vector<1x4x256xf32> to vector<4x256xf32>
    %157 = arith.mulf %156, %154 : vector<4x256xf32>
    %158 = arith.addf %148, %157 : vector<4x256xf32>
    %c15_i32 = arith.constant 15 : i32
    %159 = tpu.dynamic_rotate %66 by %c15_i32 dim 1 : vector<4x256xf32>, i32 -> vector<4x256xf32>
    %c18 = arith.constant 18 : index
    %c0_65 = arith.constant 0 : index
    %c0_66 = arith.constant 0 : index
    %160 = vector.load %arg6[%c18, %c0_65, %c0_66] : memref<49x4x256xf32, #tpu.memory_space<vmem>>, vector<1x4x256xf32>
    %161 = vector.shape_cast %160 : vector<1x4x256xf32> to vector<4x256xf32>
    %162 = arith.mulf %161, %159 : vector<4x256xf32>
    %163 = arith.addf %153, %162 : vector<4x256xf32>
    %c14_i32 = arith.constant 14 : i32
    %164 = tpu.dynamic_rotate %66 by %c14_i32 dim 1 : vector<4x256xf32>, i32 -> vector<4x256xf32>
    %c19 = arith.constant 19 : index
    %c0_67 = arith.constant 0 : index
    %c0_68 = arith.constant 0 : index
    %165 = vector.load %arg6[%c19, %c0_67, %c0_68] : memref<49x4x256xf32, #tpu.memory_space<vmem>>, vector<1x4x256xf32>
    %166 = vector.shape_cast %165 : vector<1x4x256xf32> to vector<4x256xf32>
    %167 = arith.mulf %166, %164 : vector<4x256xf32>
    %168 = arith.addf %158, %167 : vector<4x256xf32>
    %c13_i32 = arith.constant 13 : i32
    %169 = tpu.dynamic_rotate %66 by %c13_i32 dim 1 : vector<4x256xf32>, i32 -> vector<4x256xf32>
    %c20 = arith.constant 20 : index
    %c0_69 = arith.constant 0 : index
    %c0_70 = arith.constant 0 : index
    %170 = vector.load %arg6[%c20, %c0_69, %c0_70] : memref<49x4x256xf32, #tpu.memory_space<vmem>>, vector<1x4x256xf32>
    %171 = vector.shape_cast %170 : vector<1x4x256xf32> to vector<4x256xf32>
    %172 = arith.mulf %171, %169 : vector<4x256xf32>
    %173 = arith.addf %163, %172 : vector<4x256xf32>
    %c3_i32 = arith.constant 3 : i32
    %174 = tpu.dynamic_rotate %66 by %c3_i32 dim 1 : vector<4x256xf32>, i32 -> vector<4x256xf32>
    %c21 = arith.constant 21 : index
    %c0_71 = arith.constant 0 : index
    %c0_72 = arith.constant 0 : index
    %175 = vector.load %arg6[%c21, %c0_71, %c0_72] : memref<49x4x256xf32, #tpu.memory_space<vmem>>, vector<1x4x256xf32>
    %176 = vector.shape_cast %175 : vector<1x4x256xf32> to vector<4x256xf32>
    %177 = arith.mulf %176, %174 : vector<4x256xf32>
    %178 = arith.addf %168, %177 : vector<4x256xf32>
    %c2_i32 = arith.constant 2 : i32
    %179 = tpu.dynamic_rotate %66 by %c2_i32 dim 1 : vector<4x256xf32>, i32 -> vector<4x256xf32>
    %c22 = arith.constant 22 : index
    %c0_73 = arith.constant 0 : index
    %c0_74 = arith.constant 0 : index
    %180 = vector.load %arg6[%c22, %c0_73, %c0_74] : memref<49x4x256xf32, #tpu.memory_space<vmem>>, vector<1x4x256xf32>
    %181 = vector.shape_cast %180 : vector<1x4x256xf32> to vector<4x256xf32>
    %182 = arith.mulf %181, %179 : vector<4x256xf32>
    %183 = arith.addf %173, %182 : vector<4x256xf32>
    %c1_i32 = arith.constant 1 : i32
    %184 = tpu.dynamic_rotate %66 by %c1_i32 dim 1 : vector<4x256xf32>, i32 -> vector<4x256xf32>
    %c23 = arith.constant 23 : index
    %c0_75 = arith.constant 0 : index
    %c0_76 = arith.constant 0 : index
    %185 = vector.load %arg6[%c23, %c0_75, %c0_76] : memref<49x4x256xf32, #tpu.memory_space<vmem>>, vector<1x4x256xf32>
    %186 = vector.shape_cast %185 : vector<1x4x256xf32> to vector<4x256xf32>
    %187 = arith.mulf %186, %184 : vector<4x256xf32>
    %188 = arith.addf %178, %187 : vector<4x256xf32>
    %c24 = arith.constant 24 : index
    %c0_77 = arith.constant 0 : index
    %c0_78 = arith.constant 0 : index
    %189 = vector.load %arg6[%c24, %c0_77, %c0_78] : memref<49x4x256xf32, #tpu.memory_space<vmem>>, vector<1x4x256xf32>
    %190 = vector.shape_cast %189 : vector<1x4x256xf32> to vector<4x256xf32>
    %191 = arith.mulf %190, %66 : vector<4x256xf32>
    %192 = arith.addf %183, %191 : vector<4x256xf32>
    %c255_i32 = arith.constant 255 : i32
    %193 = tpu.dynamic_rotate %66 by %c255_i32 dim 1 : vector<4x256xf32>, i32 -> vector<4x256xf32>
    %c25 = arith.constant 25 : index
    %c0_79 = arith.constant 0 : index
    %c0_80 = arith.constant 0 : index
    %194 = vector.load %arg6[%c25, %c0_79, %c0_80] : memref<49x4x256xf32, #tpu.memory_space<vmem>>, vector<1x4x256xf32>
    %195 = vector.shape_cast %194 : vector<1x4x256xf32> to vector<4x256xf32>
    %196 = arith.mulf %195, %193 : vector<4x256xf32>
    %197 = arith.addf %188, %196 : vector<4x256xf32>
    %c254_i32 = arith.constant 254 : i32
    %198 = tpu.dynamic_rotate %66 by %c254_i32 dim 1 : vector<4x256xf32>, i32 -> vector<4x256xf32>
    %c26 = arith.constant 26 : index
    %c0_81 = arith.constant 0 : index
    %c0_82 = arith.constant 0 : index
    %199 = vector.load %arg6[%c26, %c0_81, %c0_82] : memref<49x4x256xf32, #tpu.memory_space<vmem>>, vector<1x4x256xf32>
    %200 = vector.shape_cast %199 : vector<1x4x256xf32> to vector<4x256xf32>
    %201 = arith.mulf %200, %198 : vector<4x256xf32>
    %202 = arith.addf %192, %201 : vector<4x256xf32>
    %c253_i32 = arith.constant 253 : i32
    %203 = tpu.dynamic_rotate %66 by %c253_i32 dim 1 : vector<4x256xf32>, i32 -> vector<4x256xf32>
    %c27 = arith.constant 27 : index
    %c0_83 = arith.constant 0 : index
    %c0_84 = arith.constant 0 : index
    %204 = vector.load %arg6[%c27, %c0_83, %c0_84] : memref<49x4x256xf32, #tpu.memory_space<vmem>>, vector<1x4x256xf32>
    %205 = vector.shape_cast %204 : vector<1x4x256xf32> to vector<4x256xf32>
    %206 = arith.mulf %205, %203 : vector<4x256xf32>
    %207 = arith.addf %197, %206 : vector<4x256xf32>
    %c243_i32 = arith.constant 243 : i32
    %208 = tpu.dynamic_rotate %66 by %c243_i32 dim 1 : vector<4x256xf32>, i32 -> vector<4x256xf32>
    %c28 = arith.constant 28 : index
    %c0_85 = arith.constant 0 : index
    %c0_86 = arith.constant 0 : index
    %209 = vector.load %arg6[%c28, %c0_85, %c0_86] : memref<49x4x256xf32, #tpu.memory_space<vmem>>, vector<1x4x256xf32>
    %210 = vector.shape_cast %209 : vector<1x4x256xf32> to vector<4x256xf32>
    %211 = arith.mulf %210, %208 : vector<4x256xf32>
    %212 = arith.addf %202, %211 : vector<4x256xf32>
    %c242_i32 = arith.constant 242 : i32
    %213 = tpu.dynamic_rotate %66 by %c242_i32 dim 1 : vector<4x256xf32>, i32 -> vector<4x256xf32>
    %c29 = arith.constant 29 : index
    %c0_87 = arith.constant 0 : index
    %c0_88 = arith.constant 0 : index
    %214 = vector.load %arg6[%c29, %c0_87, %c0_88] : memref<49x4x256xf32, #tpu.memory_space<vmem>>, vector<1x4x256xf32>
    %215 = vector.shape_cast %214 : vector<1x4x256xf32> to vector<4x256xf32>
    %216 = arith.mulf %215, %213 : vector<4x256xf32>
    %217 = arith.addf %207, %216 : vector<4x256xf32>
    %c241_i32 = arith.constant 241 : i32
    %218 = tpu.dynamic_rotate %66 by %c241_i32 dim 1 : vector<4x256xf32>, i32 -> vector<4x256xf32>
    %c30 = arith.constant 30 : index
    %c0_89 = arith.constant 0 : index
    %c0_90 = arith.constant 0 : index
    %219 = vector.load %arg6[%c30, %c0_89, %c0_90] : memref<49x4x256xf32, #tpu.memory_space<vmem>>, vector<1x4x256xf32>
    %220 = vector.shape_cast %219 : vector<1x4x256xf32> to vector<4x256xf32>
    %221 = arith.mulf %220, %218 : vector<4x256xf32>
    %222 = arith.addf %212, %221 : vector<4x256xf32>
    %c240_i32 = arith.constant 240 : i32
    %223 = tpu.dynamic_rotate %66 by %c240_i32 dim 1 : vector<4x256xf32>, i32 -> vector<4x256xf32>
    %c31 = arith.constant 31 : index
    %c0_91 = arith.constant 0 : index
    %c0_92 = arith.constant 0 : index
    %224 = vector.load %arg6[%c31, %c0_91, %c0_92] : memref<49x4x256xf32, #tpu.memory_space<vmem>>, vector<1x4x256xf32>
    %225 = vector.shape_cast %224 : vector<1x4x256xf32> to vector<4x256xf32>
    %226 = arith.mulf %225, %223 : vector<4x256xf32>
    %227 = arith.addf %217, %226 : vector<4x256xf32>
    %c239_i32 = arith.constant 239 : i32
    %228 = tpu.dynamic_rotate %66 by %c239_i32 dim 1 : vector<4x256xf32>, i32 -> vector<4x256xf32>
    %c32 = arith.constant 32 : index
    %c0_93 = arith.constant 0 : index
    %c0_94 = arith.constant 0 : index
    %229 = vector.load %arg6[%c32, %c0_93, %c0_94] : memref<49x4x256xf32, #tpu.memory_space<vmem>>, vector<1x4x256xf32>
    %230 = vector.shape_cast %229 : vector<1x4x256xf32> to vector<4x256xf32>
    %231 = arith.mulf %230, %228 : vector<4x256xf32>
    %232 = arith.addf %222, %231 : vector<4x256xf32>
    %c238_i32 = arith.constant 238 : i32
    %233 = tpu.dynamic_rotate %66 by %c238_i32 dim 1 : vector<4x256xf32>, i32 -> vector<4x256xf32>
    %c33 = arith.constant 33 : index
    %c0_95 = arith.constant 0 : index
    %c0_96 = arith.constant 0 : index
    %234 = vector.load %arg6[%c33, %c0_95, %c0_96] : memref<49x4x256xf32, #tpu.memory_space<vmem>>, vector<1x4x256xf32>
    %235 = vector.shape_cast %234 : vector<1x4x256xf32> to vector<4x256xf32>
    %236 = arith.mulf %235, %233 : vector<4x256xf32>
    %237 = arith.addf %227, %236 : vector<4x256xf32>
    %c237_i32 = arith.constant 237 : i32
    %238 = tpu.dynamic_rotate %66 by %c237_i32 dim 1 : vector<4x256xf32>, i32 -> vector<4x256xf32>
    %c34 = arith.constant 34 : index
    %c0_97 = arith.constant 0 : index
    %c0_98 = arith.constant 0 : index
    %239 = vector.load %arg6[%c34, %c0_97, %c0_98] : memref<49x4x256xf32, #tpu.memory_space<vmem>>, vector<1x4x256xf32>
    %240 = vector.shape_cast %239 : vector<1x4x256xf32> to vector<4x256xf32>
    %241 = arith.mulf %240, %238 : vector<4x256xf32>
    %242 = arith.addf %232, %241 : vector<4x256xf32>
    %c227_i32 = arith.constant 227 : i32
    %243 = tpu.dynamic_rotate %66 by %c227_i32 dim 1 : vector<4x256xf32>, i32 -> vector<4x256xf32>
    %c35 = arith.constant 35 : index
    %c0_99 = arith.constant 0 : index
    %c0_100 = arith.constant 0 : index
    %244 = vector.load %arg6[%c35, %c0_99, %c0_100] : memref<49x4x256xf32, #tpu.memory_space<vmem>>, vector<1x4x256xf32>
    %245 = vector.shape_cast %244 : vector<1x4x256xf32> to vector<4x256xf32>
    %246 = arith.mulf %245, %243 : vector<4x256xf32>
    %247 = arith.addf %237, %246 : vector<4x256xf32>
    %c226_i32 = arith.constant 226 : i32
    %248 = tpu.dynamic_rotate %66 by %c226_i32 dim 1 : vector<4x256xf32>, i32 -> vector<4x256xf32>
    %c36 = arith.constant 36 : index
    %c0_101 = arith.constant 0 : index
    %c0_102 = arith.constant 0 : index
    %249 = vector.load %arg6[%c36, %c0_101, %c0_102] : memref<49x4x256xf32, #tpu.memory_space<vmem>>, vector<1x4x256xf32>
    %250 = vector.shape_cast %249 : vector<1x4x256xf32> to vector<4x256xf32>
    %251 = arith.mulf %250, %248 : vector<4x256xf32>
    %252 = arith.addf %242, %251 : vector<4x256xf32>
    %c225_i32 = arith.constant 225 : i32
    %253 = tpu.dynamic_rotate %66 by %c225_i32 dim 1 : vector<4x256xf32>, i32 -> vector<4x256xf32>
    %c37 = arith.constant 37 : index
    %c0_103 = arith.constant 0 : index
    %c0_104 = arith.constant 0 : index
    %254 = vector.load %arg6[%c37, %c0_103, %c0_104] : memref<49x4x256xf32, #tpu.memory_space<vmem>>, vector<1x4x256xf32>
    %255 = vector.shape_cast %254 : vector<1x4x256xf32> to vector<4x256xf32>
    %256 = arith.mulf %255, %253 : vector<4x256xf32>
    %257 = arith.addf %247, %256 : vector<4x256xf32>
    %c224_i32 = arith.constant 224 : i32
    %258 = tpu.dynamic_rotate %66 by %c224_i32 dim 1 : vector<4x256xf32>, i32 -> vector<4x256xf32>
    %c38 = arith.constant 38 : index
    %c0_105 = arith.constant 0 : index
    %c0_106 = arith.constant 0 : index
    %259 = vector.load %arg6[%c38, %c0_105, %c0_106] : memref<49x4x256xf32, #tpu.memory_space<vmem>>, vector<1x4x256xf32>
    %260 = vector.shape_cast %259 : vector<1x4x256xf32> to vector<4x256xf32>
    %261 = arith.mulf %260, %258 : vector<4x256xf32>
    %262 = arith.addf %252, %261 : vector<4x256xf32>
    %c223_i32 = arith.constant 223 : i32
    %263 = tpu.dynamic_rotate %66 by %c223_i32 dim 1 : vector<4x256xf32>, i32 -> vector<4x256xf32>
    %c39 = arith.constant 39 : index
    %c0_107 = arith.constant 0 : index
    %c0_108 = arith.constant 0 : index
    %264 = vector.load %arg6[%c39, %c0_107, %c0_108] : memref<49x4x256xf32, #tpu.memory_space<vmem>>, vector<1x4x256xf32>
    %265 = vector.shape_cast %264 : vector<1x4x256xf32> to vector<4x256xf32>
    %266 = arith.mulf %265, %263 : vector<4x256xf32>
    %267 = arith.addf %257, %266 : vector<4x256xf32>
    %c222_i32 = arith.constant 222 : i32
    %268 = tpu.dynamic_rotate %66 by %c222_i32 dim 1 : vector<4x256xf32>, i32 -> vector<4x256xf32>
    %c40 = arith.constant 40 : index
    %c0_109 = arith.constant 0 : index
    %c0_110 = arith.constant 0 : index
    %269 = vector.load %arg6[%c40, %c0_109, %c0_110] : memref<49x4x256xf32, #tpu.memory_space<vmem>>, vector<1x4x256xf32>
    %270 = vector.shape_cast %269 : vector<1x4x256xf32> to vector<4x256xf32>
    %271 = arith.mulf %270, %268 : vector<4x256xf32>
    %272 = arith.addf %262, %271 : vector<4x256xf32>
    %c221_i32 = arith.constant 221 : i32
    %273 = tpu.dynamic_rotate %66 by %c221_i32 dim 1 : vector<4x256xf32>, i32 -> vector<4x256xf32>
    %c41 = arith.constant 41 : index
    %c0_111 = arith.constant 0 : index
    %c0_112 = arith.constant 0 : index
    %274 = vector.load %arg6[%c41, %c0_111, %c0_112] : memref<49x4x256xf32, #tpu.memory_space<vmem>>, vector<1x4x256xf32>
    %275 = vector.shape_cast %274 : vector<1x4x256xf32> to vector<4x256xf32>
    %276 = arith.mulf %275, %273 : vector<4x256xf32>
    %277 = arith.addf %267, %276 : vector<4x256xf32>
    %c211_i32 = arith.constant 211 : i32
    %278 = tpu.dynamic_rotate %66 by %c211_i32 dim 1 : vector<4x256xf32>, i32 -> vector<4x256xf32>
    %c42 = arith.constant 42 : index
    %c0_113 = arith.constant 0 : index
    %c0_114 = arith.constant 0 : index
    %279 = vector.load %arg6[%c42, %c0_113, %c0_114] : memref<49x4x256xf32, #tpu.memory_space<vmem>>, vector<1x4x256xf32>
    %280 = vector.shape_cast %279 : vector<1x4x256xf32> to vector<4x256xf32>
    %281 = arith.mulf %280, %278 : vector<4x256xf32>
    %282 = arith.addf %272, %281 : vector<4x256xf32>
    %c210_i32 = arith.constant 210 : i32
    %283 = tpu.dynamic_rotate %66 by %c210_i32 dim 1 : vector<4x256xf32>, i32 -> vector<4x256xf32>
    %c43 = arith.constant 43 : index
    %c0_115 = arith.constant 0 : index
    %c0_116 = arith.constant 0 : index
    %284 = vector.load %arg6[%c43, %c0_115, %c0_116] : memref<49x4x256xf32, #tpu.memory_space<vmem>>, vector<1x4x256xf32>
    %285 = vector.shape_cast %284 : vector<1x4x256xf32> to vector<4x256xf32>
    %286 = arith.mulf %285, %283 : vector<4x256xf32>
    %287 = arith.addf %277, %286 : vector<4x256xf32>
    %c209_i32 = arith.constant 209 : i32
    %288 = tpu.dynamic_rotate %66 by %c209_i32 dim 1 : vector<4x256xf32>, i32 -> vector<4x256xf32>
    %c44 = arith.constant 44 : index
    %c0_117 = arith.constant 0 : index
    %c0_118 = arith.constant 0 : index
    %289 = vector.load %arg6[%c44, %c0_117, %c0_118] : memref<49x4x256xf32, #tpu.memory_space<vmem>>, vector<1x4x256xf32>
    %290 = vector.shape_cast %289 : vector<1x4x256xf32> to vector<4x256xf32>
    %291 = arith.mulf %290, %288 : vector<4x256xf32>
    %292 = arith.addf %282, %291 : vector<4x256xf32>
    %c208_i32 = arith.constant 208 : i32
    %293 = tpu.dynamic_rotate %66 by %c208_i32 dim 1 : vector<4x256xf32>, i32 -> vector<4x256xf32>
    %c45 = arith.constant 45 : index
    %c0_119 = arith.constant 0 : index
    %c0_120 = arith.constant 0 : index
    %294 = vector.load %arg6[%c45, %c0_119, %c0_120] : memref<49x4x256xf32, #tpu.memory_space<vmem>>, vector<1x4x256xf32>
    %295 = vector.shape_cast %294 : vector<1x4x256xf32> to vector<4x256xf32>
    %296 = arith.mulf %295, %293 : vector<4x256xf32>
    %297 = arith.addf %287, %296 : vector<4x256xf32>
    %c207_i32 = arith.constant 207 : i32
    %298 = tpu.dynamic_rotate %66 by %c207_i32 dim 1 : vector<4x256xf32>, i32 -> vector<4x256xf32>
    %c46 = arith.constant 46 : index
    %c0_121 = arith.constant 0 : index
    %c0_122 = arith.constant 0 : index
    %299 = vector.load %arg6[%c46, %c0_121, %c0_122] : memref<49x4x256xf32, #tpu.memory_space<vmem>>, vector<1x4x256xf32>
    %300 = vector.shape_cast %299 : vector<1x4x256xf32> to vector<4x256xf32>
    %301 = arith.mulf %300, %298 : vector<4x256xf32>
    %302 = arith.addf %292, %301 : vector<4x256xf32>
    %c206_i32 = arith.constant 206 : i32
    %303 = tpu.dynamic_rotate %66 by %c206_i32 dim 1 : vector<4x256xf32>, i32 -> vector<4x256xf32>
    %c47 = arith.constant 47 : index
    %c0_123 = arith.constant 0 : index
    %c0_124 = arith.constant 0 : index
    %304 = vector.load %arg6[%c47, %c0_123, %c0_124] : memref<49x4x256xf32, #tpu.memory_space<vmem>>, vector<1x4x256xf32>
    %305 = vector.shape_cast %304 : vector<1x4x256xf32> to vector<4x256xf32>
    %306 = arith.mulf %305, %303 : vector<4x256xf32>
    %307 = arith.addf %297, %306 : vector<4x256xf32>
    %c205_i32 = arith.constant 205 : i32
    %308 = tpu.dynamic_rotate %66 by %c205_i32 dim 1 : vector<4x256xf32>, i32 -> vector<4x256xf32>
    %c48 = arith.constant 48 : index
    %c0_125 = arith.constant 0 : index
    %c0_126 = arith.constant 0 : index
    %309 = vector.load %arg6[%c48, %c0_125, %c0_126] : memref<49x4x256xf32, #tpu.memory_space<vmem>>, vector<1x4x256xf32>
    %310 = vector.shape_cast %309 : vector<1x4x256xf32> to vector<4x256xf32>
    %311 = arith.mulf %310, %308 : vector<4x256xf32>
    %312 = arith.addf %302, %311 : vector<4x256xf32>
    %313 = arith.addf %312, %307 : vector<4x256xf32>
    %314 = vector.extract_strided_slice %313 {offsets = [0, 0], sizes = [2, 256], strides = [1, 1]} : vector<4x256xf32> to vector<2x256xf32>
    %315 = vector.extract_strided_slice %313 {offsets = [2, 0], sizes = [2, 256], strides = [1, 1]} : vector<4x256xf32> to vector<2x256xf32>
    %316 = arith.addf %314, %315 : vector<2x256xf32>
    %317 = arith.negf %316 : vector<2x256xf32>
    %318 = math.exp %317 : vector<2x256xf32>
    %cst_127 = arith.constant 1.000000e+00 : f32
    %319 = vector.broadcast %cst_127 : f32 to vector<2x256xf32>
    %320 = arith.addf %319, %318 : vector<2x256xf32>
    %321 = arith.divf %319, %320 : vector<2x256xf32>
    %322 = vector.extract_strided_slice %321 {offsets = [0, 0], sizes = [1, 256], strides = [1, 1]} : vector<2x256xf32> to vector<1x256xf32>
    %323 = vector.broadcast %322 : vector<1x256xf32> to vector<8x256xf32>
    %324 = arith.mulf %323, %41 : vector<8x256xf32>
    %325 = vector.extract_strided_slice %0 {offsets = [0, 0, 0], sizes = [1, 8, 256], strides = [1, 1, 1]} : vector<2x8x256xf32> to vector<1x8x256xf32>
    %326 = vector.shape_cast %325 : vector<1x8x256xf32> to vector<8x256xf32>
    %327 = arith.addf %324, %326 : vector<8x256xf32>
    %c0_128 = arith.constant 0 : index
    %c0_129 = arith.constant 0 : index
    %c0_130 = arith.constant 0 : index
    %328 = vector.load %arg7[%c0_128, %c0_129, %c0_130] : memref<2x8x256xf32, #tpu.memory_space<vmem>>, vector<1x8x256xf32>
    %329 = vector.shape_cast %328 : vector<1x8x256xf32> to vector<8x256xf32>
    %330 = vector.shape_cast %327 : vector<8x256xf32> to vector<1x8x256xf32>
    tpu.vector_store %arg7[%c0_128, %c0_129, %c0_130], %330 {strides = array<i32>} : memref<2x8x256xf32, #tpu.memory_space<vmem>>, vector<1x8x256xf32>,
    %331 = vector.extract_strided_slice %321 {offsets = [1, 0], sizes = [1, 256], strides = [1, 1]} : vector<2x256xf32> to vector<1x256xf32>
    %332 = vector.broadcast %331 : vector<1x256xf32> to vector<8x256xf32>
    %333 = arith.mulf %332, %59 : vector<8x256xf32>
    %334 = vector.extract_strided_slice %0 {offsets = [1, 0, 0], sizes = [1, 8, 256], strides = [1, 1, 1]} : vector<2x8x256xf32> to vector<1x8x256xf32>
    %335 = vector.shape_cast %334 : vector<1x8x256xf32> to vector<8x256xf32>
    %336 = arith.addf %333, %335 : vector<8x256xf32>
    %c1_131 = arith.constant 1 : index
    %c0_132 = arith.constant 0 : index
    %c0_133 = arith.constant 0 : index
    %337 = vector.load %arg7[%c1_131, %c0_132, %c0_133] : memref<2x8x256xf32, #tpu.memory_space<vmem>>, vector<1x8x256xf32>
    %338 = vector.shape_cast %337 : vector<1x8x256xf32> to vector<8x256xf32>
    %339 = vector.shape_cast %336 : vector<8x256xf32> to vector<1x8x256xf32>
    tpu.vector_store %arg7[%c1_131, %c0_132, %c0_133], %339 {strides = array<i32>} : memref<2x8x256xf32, #tpu.memory_space<vmem>>, vector<1x8x256xf32>,
    return
  }
  func.func @transform_0(%arg0: i32) -> (i32, i32, i32) {
    %c0_i32 = arith.constant 0 : i32
    %c0_i32_0 = arith.constant 0 : i32
    %c0_i32_1 = arith.constant 0 : i32
    return %arg0, %c0_i32, %c0_i32_0 : i32, i32, i32
  }
  func.func @transform_1(%arg0: i32) -> (i32, i32) {
    %c0_i32 = arith.constant 0 : i32
    %c0_i32_0 = arith.constant 0 : i32
    %c0_i32_1 = arith.constant 0 : i32
    return %c0_i32, %c0_i32_0 : i32, i32
  }
  func.func @transform_2(%arg0: i32) -> (i32, i32) {
    %c0_i32 = arith.constant 0 : i32
    %c0_i32_0 = arith.constant 0 : i32
    %c0_i32_1 = arith.constant 0 : i32
    return %c0_i32, %c0_i32_0 : i32, i32
  }
  func.func @transform_3(%arg0: i32) -> (i32, i32) {
    %c0_i32 = arith.constant 0 : i32
    %c0_i32_0 = arith.constant 0 : i32
    %c0_i32_1 = arith.constant 0 : i32
    return %c0_i32, %c0_i32_0 : i32, i32
  }
  func.func @transform_4(%arg0: i32) -> (i32, i32) {
    %c0_i32 = arith.constant 0 : i32
    %c0_i32_0 = arith.constant 0 : i32
    %c0_i32_1 = arith.constant 0 : i32
    return %c0_i32, %c0_i32_0 : i32, i32
  }
  func.func @transform_5(%arg0: i32) -> (i32, i32, i32) {
    %c0_i32 = arith.constant 0 : i32
    %c0_i32_0 = arith.constant 0 : i32
    %c0_i32_1 = arith.constant 0 : i32
    %c0_i32_2 = arith.constant 0 : i32
    return %c0_i32, %c0_i32_0, %c0_i32_1 : i32, i32, i32
  }
  func.func @transform_6(%arg0: i32) -> (i32, i32, i32) {
    %c0_i32 = arith.constant 0 : i32
    %c0_i32_0 = arith.constant 0 : i32
    %c0_i32_1 = arith.constant 0 : i32
    return %arg0, %c0_i32, %c0_i32_0 : i32, i32, i32
  }
}

</mosaic_0001>

<llo_original>
// kernel: tpu_custom_call.1
$region0: #{tpu_custom_call.1}
  #allocation0 [shape = 'u32[]', space=smem, size = 0x4, offset = 0x4, fixed_abs, tag = 'smem constant byte address 0x4 - core index']
  #allocation1 [shape = 'u32[72,128]{1,0:T(1,128)}', space=vmem, size = 0x9000, scoped, tag = 'internal scratch']
  %s0 = inlined_call_operand.hbm [shape: f32[4,8,256], index: 0, kind: input, shape index: {}]
  %s1 = inlined_call_operand.vmem [shape: f32[4,8], index: 1, kind: input, shape index: {}]
  %s2 = inlined_call_operand.vmem [shape: f32[4,1], index: 2, kind: input, shape index: {}]
  %s3 = inlined_call_operand.vmem [shape: f32[8,4], index: 3, kind: input, shape index: {}]
  %s4 = inlined_call_operand.vmem [shape: f32[8,1], index: 4, kind: input, shape index: {}]
  %s5 = inlined_call_operand.hbm [shape: f32[49,4,256], index: 5, kind: input, shape index: {}]
  %s6 = inlined_call_operand.hbm [shape: f32[4,8,256], index: 6, kind: output, shape index: {}]
  %s7 = sld [smem:[#allocation0]]
  $region65: #{tpu_custom_call.1} parent=0
    _
  %s9 = ssub.s32 1, %s7
  %s10 = scalar_select 0, %s9, %s7
  $region1: #{tpu_custom_call.1} parent=0
    #allocation2 [shape = 'u8[32768]{0}', space=vmem, size = 0x8000, scoped, tag = 'input window, operand 0']
    #allocation3 [shape = 's32[2]{0}', space=sflag, size = 0x8, scoped, tag = 'scoped memory for tpu_custom_call.1']
    #allocation4 [shape = 's32[2]{0}', space=sflag, size = 0x8, scoped, tag = 'scoped memory for tpu_custom_call.1']
    #allocation5 [shape = 'u8[200704]{0}', space=vmem, size = 0x31000, scoped, tag = 'input window, operand 5, single buffered']
    #allocation6 [shape = 's32[1]{0}', space=sflag, size = 0x4, scoped, tag = 'scoped memory for tpu_custom_call.1']
    #allocation7 [shape = 'u8[32768]{0}', space=vmem, size = 0x8000, scoped, tag = 'output window, operand 0']
    %11 = vsyncpa [#allocation3], 0
    %s12 = scalar_lea.sflag [#allocation3], 1
    %13 = vsyncpa %s12, 0
    %14 = vsyncpa [#allocation6], 0
    %15 = vsyncpa [#allocation4], 0
    %s16 = scalar_lea.sflag [#allocation4], 1
    %17 = vsyncpa %s16, 0
    loop: start=0, step=1, limit=4
    $region2: #{tpu_custom_call.1} parent=1 // loop_pre_header
      _
    $region3: #{tpu_custom_call.1} parent=1 // loop_header
      %s19 = sphi 0, %s23
      %p20 = scmp.ge.s32.totalorder %s19, 4
      %s29 = sphi 0, %s31
      %s32 = sphi 0, %s29
      %s33 = sphi 0, %s32
      %s49 = sphi 0, %s33
      %s53 = sphi 0, %s53
      %s55 = sphi 0, %s53
      %s56 = sphi 0, %s55
      %s70 = sphi 0, %s56
      %s74 = sphi 0, %s74
      %s76 = sphi 0, %s74
      %s77 = sphi 0, %s76
      %s91 = sphi 0, %s77
      %s95 = sphi 0, %s95
      %s97 = sphi 0, %s95
      %s98 = sphi 0, %s97
      %s112 = sphi 0, %s98
      %s116 = sphi 0, %s116
      %s118 = sphi 0, %s116
      %s119 = sphi 0, %s118
      %s133 = sphi 0, %s119
      %s137 = sphi 0, %s137
      %s139 = sphi 0, %s137
      %s140 = sphi 0, %s139
      %s154 = sphi 0, %s140
      %s160 = sphi 0, %s162
      %s163 = sphi 0, %s160
      %s164 = sphi 0, %s163
      %s180 = sphi 0, %s164
    $region4: #{tpu_custom_call.1} parent=1 // loop_header_branch
      %22 = sbr.rel (%p20) target = $region8
    $region5: #{tpu_custom_call.1} parent=1 // loop_body
      %s24 = ssub.s32 %s19, 1
      %s25 = ssub.s32 %s19, 2
      %s26 = sadd.s32 %s19, 1
      %s27 = ssub.s32 %s19, %s26
      %p28 = scmp.eq.s32.totalorder %s27, 0
      %s30 = sadd.s32 %s29, 1
      %s31 = scalar_select %p28, %s29, %s30
      %p34 = pneg %p28
      %p35 = scmp.eq.s32.totalorder %s19, 1
      %p36 = por %p34, %p35
      %p37 = scmp.ne.s32.totalorder %s29, %s32
      %p38 = scmp.eq.s32.totalorder %s19, 0
      %p39 = por %p37, %p38
      %p40 = scmp.ne.s32.totalorder %s29, %s32
      %p41 = scmp.eq.s32.totalorder %s24, 1
      %p42 = por %p40, %p41
      %p43 = scmp.ne.s32.totalorder %s32, %s33
      %p44 = scmp.eq.s32.totalorder %s24, 0
      %p45 = por %p43, %p44
      %p46 = scmp.ne.s32.totalorder %s32, %s33
      %p47 = scmp.eq.s32.totalorder %s25, 1
      %p48 = por %p46, %p47
      %p50 = scmp.ne.s32.totalorder %s33, %s49
      %p51 = scmp.eq.s32.totalorder %s25, 0
      %p52 = por %p50, %p51
      %s54 = sadd.s32 %s53, 1
      %p57 = scmp.eq.s32.totalorder %s19, 1
      %p58 = scmp.ne.s32.totalorder %s53, %s55
      %p59 = scmp.eq.s32.totalorder %s19, 0
      %p60 = por %p58, %p59
      %p61 = scmp.ne.s32.totalorder %s53, %s55
      %p62 = scmp.eq.s32.totalorder %s24, 1
      %p63 = por %p61, %p62
      %p64 = scmp.ne.s32.totalorder %s55, %s56
      %p65 = scmp.eq.s32.totalorder %s24, 0
      %p66 = por %p64, %p65
      %p67 = scmp.ne.s32.totalorder %s55, %s56
      %p68 = scmp.eq.s32.totalorder %s25, 1
      %p69 = por %p67, %p68
      %p71 = scmp.ne.s32.totalorder %s56, %s70
      %p72 = scmp.eq.s32.totalorder %s25, 0
      %p73 = por %p71, %p72
      %s75 = sadd.s32 %s74, 1
      %p78 = scmp.eq.s32.totalorder %s19, 1
      %p79 = scmp.ne.s32.totalorder %s74, %s76
      %p80 = scmp.eq.s32.totalorder %s19, 0
      %p81 = por %p79, %p80
      %p82 = scmp.ne.s32.totalorder %s74, %s76
      %p83 = scmp.eq.s32.totalorder %s24, 1
      %p84 = por %p82, %p83
      %p85 = scmp.ne.s32.totalorder %s76, %s77
      %p86 = scmp.eq.s32.totalorder %s24, 0
      %p87 = por %p85, %p86
      %p88 = scmp.ne.s32.totalorder %s76, %s77
      %p89 = scmp.eq.s32.totalorder %s25, 1
      %p90 = por %p88, %p89
      %p92 = scmp.ne.s32.totalorder %s77, %s91
      %p93 = scmp.eq.s32.totalorder %s25, 0
      %p94 = por %p92, %p93
      %s96 = sadd.s32 %s95, 1
      %p99 = scmp.eq.s32.totalorder %s19, 1
      %p100 = scmp.ne.s32.totalorder %s95, %s97
      %p101 = scmp.eq.s32.totalorder %s19, 0
      %p102 = por %p100, %p101
      %p103 = scmp.ne.s32.totalorder %s95, %s97
      %p104 = scmp.eq.s32.totalorder %s24, 1
      %p105 = por %p103, %p104
      %p106 = scmp.ne.s32.totalorder %s97, %s98
      %p107 = scmp.eq.s32.totalorder %s24, 0
      %p108 = por %p106, %p107
      %p109 = scmp.ne.s32.totalorder %s97, %s98
      %p110 = scmp.eq.s32.totalorder %s25, 1
      %p111 = por %p109, %p110
      %p113 = scmp.ne.s32.totalorder %s98, %s112
      %p114 = scmp.eq.s32.totalorder %s25, 0
      %p115 = por %p113, %p114
      %s117 = sadd.s32 %s116, 1
      %p120 = scmp.eq.s32.totalorder %s19, 1
      %p121 = scmp.ne.s32.totalorder %s116, %s118
      %p122 = scmp.eq.s32.totalorder %s19, 0
      %p123 = por %p121, %p122
      %p124 = scmp.ne.s32.totalorder %s116, %s118
      %p125 = scmp.eq.s32.totalorder %s24, 1
      %p126 = por %p124, %p125
      %p127 = scmp.ne.s32.totalorder %s118, %s119
      %p128 = scmp.eq.s32.totalorder %s24, 0
      %p129 = por %p127, %p128
      %p130 = scmp.ne.s32.totalorder %s118, %s119
      %p131 = scmp.eq.s32.totalorder %s25, 1
      %p132 = por %p130, %p131
      %p134 = scmp.ne.s32.totalorder %s119, %s133
      %p135 = scmp.eq.s32.totalorder %s25, 0
      %p136 = por %p134, %p135
      %s138 = sadd.s32 %s137, 1
      %p141 = scmp.eq.s32.totalorder %s19, 1
      %p142 = scmp.ne.s32.totalorder %s137, %s139
      %p143 = scmp.eq.s32.totalorder %s19, 0
      %p144 = por %p142, %p143
      %p145 = scmp.ne.s32.totalorder %s137, %s139
      %p146 = scmp.eq.s32.totalorder %s24, 1
      %p147 = por %p145, %p146
      %p148 = scmp.ne.s32.totalorder %s139, %s140
      %p149 = scmp.eq.s32.totalorder %s24, 0
      %p150 = por %p148, %p149
      %p151 = scmp.ne.s32.totalorder %s139, %s140
      %p152 = scmp.eq.s32.totalorder %s25, 1
      %p153 = por %p151, %p152
      %p155 = scmp.ne.s32.totalorder %s140, %s154
      %p156 = scmp.eq.s32.totalorder %s25, 0
      %p157 = por %p155, %p156
      %s158 = ssub.s32 %s19, %s26
      %p159 = scmp.eq.s32.totalorder %s158, 0
      %s161 = sadd.s32 %s160, 1
      %s162 = scalar_select %p159, %s160, %s161
      %p165 = pneg %p159
      %p166 = scmp.eq.s32.totalorder %s19, 1
      %p167 = por %p165, %p166
      %p168 = scmp.ne.s32.totalorder %s160, %s163
      %p169 = scmp.eq.s32.totalorder %s19, 0
      %p170 = por %p168, %p169
      %p171 = scmp.ne.s32.totalorder %s160, %s163
      %p172 = scmp.eq.s32.totalorder %s24, 1
      %p173 = por %p171, %p172
      %p174 = scmp.ne.s32.totalorder %s163, %s164
      %p175 = scmp.eq.s32.totalorder %s24, 0
      %p176 = por %p174, %p175
      %p177 = scmp.ne.s32.totalorder %s163, %s164
      %p178 = scmp.eq.s32.totalorder %s25, 1
      %p179 = por %p177, %p178
      %p181 = scmp.ne.s32.totalorder %s164, %s180
      %p182 = scmp.eq.s32.totalorder %s25, 0
      %p183 = por %p181, %p182
      %p184 = scmp.le.s32.totalorder 1, %s19
      %p185 = scmp.lt.s32.totalorder %s19, 3
      %p186 = pnand %p184, %p185
      %p187 = pneg %p186
      // Predicated region
      $region9: #{tpu_custom_call.1} parent=5 // pred_check
        _
      $region10: #{tpu_custom_call.1} parent=5 // pred_check_branch
        %189 = sbr.rel (%p186) target = $region12
      $region11: #{tpu_custom_call.1} parent=5 // pred_region
        %s190 = ssub.s32 %s19, 1
        // Predicated region
        $region13: #{tpu_custom_call.1} parent=11 // pred_check
          %p191 = pneg %p66
        $region14: #{tpu_custom_call.1} parent=11 // pred_check_branch
          %193 = sbr.rel (%p191) target = $region16
        $region15: #{tpu_custom_call.1} parent=11 // pred_region
          _
        $region16: #{tpu_custom_call.1} parent=11 // pred_fallthru
          _
        // Predicated region
        $region17: #{tpu_custom_call.1} parent=11 // pred_check
          %p194 = pneg %p87
        $region18: #{tpu_custom_call.1} parent=11 // pred_check_branch
          %196 = sbr.rel (%p194) target = $region20
        $region19: #{tpu_custom_call.1} parent=11 // pred_region
          _
        $region20: #{tpu_custom_call.1} parent=11 // pred_fallthru
          _
        // Predicated region
        $region21: #{tpu_custom_call.1} parent=11 // pred_check
          %p197 = pneg %p108
        $region22: #{tpu_custom_call.1} parent=11 // pred_check_branch
          %199 = sbr.rel (%p197) target = $region24
        $region23: #{tpu_custom_call.1} parent=11 // pred_region
          _
        $region24: #{tpu_custom_call.1} parent=11 // pred_fallthru
          _
        // Predicated region
        $region25: #{tpu_custom_call.1} parent=11 // pred_check
          %p200 = pneg %p129
        $region26: #{tpu_custom_call.1} parent=11 // pred_check_branch
          %202 = sbr.rel (%p200) target = $region28
        $region27: #{tpu_custom_call.1} parent=11 // pred_region
          _
        $region28: #{tpu_custom_call.1} parent=11 // pred_fallthru
          _
        // Predicated region
        $region29: #{tpu_custom_call.1} parent=11 // pred_check
          %p203 = pneg %p150
        $region30: #{tpu_custom_call.1} parent=11 // pred_check_branch
          %205 = sbr.rel (%p203) target = $region32
        $region31: #{tpu_custom_call.1} parent=11 // pred_region
          %207 = vsyncadd [#allocation6], 0
          %s208 = sshll.u32 %s5, 4
          %s209 = int_to_ptr.hbm [resolvable:$true] %s208
          %s210 = sshll.u32 [#allocation5], 4
          %s211 = int_to_ptr.vmem [resolvable:$true] %s210
          %216 = dma.hbm_to_vmem [thread:$0]  %s209, 6272, %s211, [#allocation6], 128, 128, 8
        $region32: #{tpu_custom_call.1} parent=11 // pred_fallthru
          _
      $region12: #{tpu_custom_call.1} parent=5 // pred_fallthru
        _
      %p217 = scmp.lt.s32.totalorder %s19, 2
      // Predicated region
      $region33: #{tpu_custom_call.1} parent=5 // pred_check
        %p218 = pneg %p217
      $region34: #{tpu_custom_call.1} parent=5 // pred_check_branch
        %220 = sbr.rel (%p218) target = $region36
      $region35: #{tpu_custom_call.1} parent=5 // pred_region
        // Predicated region
        $region37: #{tpu_custom_call.1} parent=35 // pred_check
          %p221 = pneg %p39
        $region38: #{tpu_custom_call.1} parent=35 // pred_check_branch
          %223 = sbr.rel (%p221) target = $region40
        $region39: #{tpu_custom_call.1} parent=35 // pred_region
          %s224 = sand.u32 %s29, 1
          %s225 = scalar_lea.sflag [#allocation3], %s224
          %s226 = sand.u32 %s29, 1
          %s227 = smul.addr %s226, 32
          %s228 = scalar_lea.vmem [#allocation2], %s227
          %s229 = smul.u32 2, %s19
          %231 = vsyncadd %s225, 0
          %s232 = smul.addr %s229, 2
          %s233 = smul.addr %s232, 8
          %s234 = scalar_lea.hbm %s0, %s233
          %s235 = sshll.u32 %s234, 4
          %s236 = int_to_ptr.hbm [resolvable:$true] %s235
          %s237 = sshll.u32 %s228, 4
          %s238 = int_to_ptr.vmem [resolvable:$true] %s237
          %243 = dma.hbm_to_vmem [thread:$0]  %s236, 512, %s238, %s225, 256, 256, 16
        $region40: #{tpu_custom_call.1} parent=35 // pred_fallthru
          _
      $region36: #{tpu_custom_call.1} parent=5 // pred_fallthru
        _
      %p244 = scmp.le.s32.totalorder 1, %s19
      %p245 = scmp.lt.s32.totalorder %s19, 3
      %p246 = pnand %p244, %p245
      %p247 = pneg %p246
      // Predicated region
      $region41: #{tpu_custom_call.1} parent=5 // pred_check
        _
      $region42: #{tpu_custom_call.1} parent=5 // pred_check_branch
        %249 = sbr.rel (%p246) target = $region44
      $region43: #{tpu_custom_call.1} parent=5 // pred_region
        %s250 = ssub.s32 %s19, 1
        %s251 = sand.u32 %s32, 1
        %s252 = scalar_lea.sflag [#allocation3], %s251
        %s253 = sand.u32 %s32, 1
        %s254 = smul.addr %s253, 32
        %s255 = scalar_lea.vmem [#allocation2], %s254
        // Predicated region
        $region45: #{tpu_custom_call.1} parent=43 // pred_check
          %p256 = pneg %p45
        $region46: #{tpu_custom_call.1} parent=43 // pred_check_branch
          %258 = sbr.rel (%p256) target = $region48
        $region47: #{tpu_custom_call.1} parent=43 // pred_region
          %260 = dma.done %s252, 512
        $region48: #{tpu_custom_call.1} parent=43 // pred_fallthru
          _
        // Predicated region
        $region49: #{tpu_custom_call.1} parent=43 // pred_check
          %p261 = pneg %p150
        $region50: #{tpu_custom_call.1} parent=43 // pred_check_branch
          %263 = sbr.rel (%p261) target = $region52
        $region51: #{tpu_custom_call.1} parent=43 // pred_region
          %265 = dma.done [#allocation6], 6272
        $region52: #{tpu_custom_call.1} parent=43 // pred_fallthru
          _
        %s266 = sand.u32 %s32, 1
        %s267 = scalar_lea.sflag [#allocation3], %s266
        %s268 = sand.u32 %s32, 1
        %s269 = smul.addr %s268, 32
        %s270 = scalar_lea.vmem [#allocation2], %s269
        %p271 = pneg %p45
        %p272 = pneg %p42
        %p273 = pneg %p66
        %p274 = pneg %p63
        %p275 = pneg %p87
        %p276 = pneg %p84
        %p277 = pneg %p108
        %p278 = pneg %p105
        %p279 = pneg %p129
        %p280 = pneg %p126
        %p281 = pneg %p150
        %p282 = pneg %p147
        %p283 = pneg %p176
        %p284 = pneg %p173
        %s285 = sand.u32 %s163, 1
        %s286 = scalar_lea.sflag [#allocation4], %s285
        %s287 = sand.u32 %s163, 1
        %s288 = smul.addr %s287, 32
        %s289 = scalar_lea.vmem [#allocation7], %s288
        %s290 = smul.u32 2, %s24
        %s291 = smul.u32 2, %s24
        %v292 = vld [vmem:[%s255] sm:$0xff]
        %v293 = vld [vmem:[%s255 + $0x8] sm:$0xff]
        %v294 = vld [vmem:[%s255 + $0x10] sm:$0xff]
        %v295 = vld [vmem:[%s255 + $0x18] sm:$0xff]
        %v296 = vmax.f32 %v292, %v293
        %297 = vmax.xlane.f32.xlu0 %v296
        %v298 = vpop.xlane.xlu0 %297
        %v299 = vadd.f32 %v292, %v293
        %300 = vadd.xlane.f32.xlu0 %v299
        %v301 = vpop.xlane.xlu0 %300
        %v302 = vmul.f32 %v301, 0.00390625
        %v303 = vmax.f32 %v294, %v295
        %304 = vmax.xlane.f32.xlu0 %v303
        %v305 = vpop.xlane.xlu0 %304
        %v306 = vadd.f32 %v294, %v295
        %307 = vadd.xlane.f32.xlu0 %v306
        %v308 = vpop.xlane.xlu0 %307
        %v309 = vmul.f32 %v308, 0.00390625
        %vm310 = vcmask 7168
        %v311 = vsel %vm310, %v298, %v302
        %vm312 = vcmask 15360
        %v313 = vsel %vm312, %v311, %v305
        %vm314 = vcmask 23552
        %v315 = vsel %vm314, %v313, %v309
        %v316 = vld [vmem:[%s1] sm:$0xf]
        %v317 = vld [vmem:[%s2] sm:$0xf]
        %319 = vset.pattern.permute.xlu0 0
        %320 = vperm.xlu0 %319, %v317
        %v321 = vpop.permute.xlu0 %320
        %vm323 = vcmask 64512
        %v325 = vsel %vm323, %v316, 0
        %327 = vmatpush.msra.mxu0 0.0
        %328 = vmatpush.msra.mxu0 0.0
        %329 = vmatpush.msra.mxu0 0.0
        %330 = vmatpush.msra.mxu0 0.0
        %331 = vmatpush.msra.mxu0 0.0
        %332 = vmatpush.msra.mxu0 0.0
        %333 = vmatpush.msra.mxu0 0.0
        %334 = vmatpush.msra.mxu0 0.0
        %335 = vmatpush.msra.mxu0 0.0
        %336 = vmatpush.msra.mxu0 0.0
        %337 = vmatpush.msra.mxu0 0.0
        %338 = vmatpush.msra.mxu0 0.0
        %339 = vmatpush.msra.mxu0 0.0
        %340 = vmatpush.msra.mxu0 0.0
        %341 = vmatpush.msra.mxu0 0.0
        %342 = vmatpush.msra.mxu0 %v315
        %343 = vmatmul.f32.gmra.mxu0 %v325
        %v344 = vpop.f32.mrf.mxu0
        %v345 = vadd.f32 %v321, %v344
        %346 = vdwg.mxu0
        %v347 = vmax.f32 %v345, 0.0
        %v348 = vld [vmem:[%s3] sm:$0xff]
        %v349 = vld [vmem:[%s4] sm:$0xff]
        %351 = vset.pattern.permute.xlu0 0
        %352 = vperm.xlu0 %351, %v349
        %v353 = vpop.permute.xlu0 %352
        %vm355 = vcmask 31744
        %v357 = vsel %vm355, %v348, 0
        %vm359 = vcmask 1043456
        %v361 = vsel %vm359, %v347, 0
        %363 = vmatpush.msra.mxu0 0.0
        %364 = vmatpush.msra.mxu0 0.0
        %365 = vmatpush.msra.mxu0 0.0
        %366 = vmatpush.msra.mxu0 0.0
        %367 = vmatpush.msra.mxu0 0.0
        %368 = vmatpush.msra.mxu0 0.0
        %369 = vmatpush.msra.mxu0 0.0
        %370 = vmatpush.msra.mxu0 0.0
        %371 = vmatpush.msra.mxu0 0.0
        %372 = vmatpush.msra.mxu0 0.0
        %373 = vmatpush.msra.mxu0 0.0
        %374 = vmatpush.msra.mxu0 0.0
        %375 = vmatpush.msra.mxu0 0.0
        %376 = vmatpush.msra.mxu0 0.0
        %377 = vmatpush.msra.mxu0 0.0
        %378 = vmatpush.msra.mxu0 %v361
        %379 = vmatmul.f32.gmra.mxu0 %v357
        %v380 = vpop.f32.mrf.mxu0
        %v381 = vadd.f32 %v353, %v380
        %382 = vdwg.mxu0
        %384 = vrot.lane.b32.xlu0 %v381, 127
        %v385 = vpop.permute.xlu0 %384
        %v387 = vadd.f32 %v381, %v385
        %v388 = vxor.u32 %v387, 2147483648
        %v389 = vmul.f32 %v388, 1.442695
        %v390 = vpow.pop %v389
        %v391 = vadd.f32 %v390, 1.0
        %v392 = vrcp.pop %v391
        %v393 = vmul.f32 %v391, %v392
        %v394 = vsub.f32 1.0, %v393
        %v395 = vmul.f32 %v392, %v394
        %v396 = vadd.f32 %v392, %v395
        %vm397 = vweird.f32 %v391
        %vm398 = vweird.f32 %v392
        %vm399 = vmor %vm397, %vm398
        %v400 = vsel %vm399, %v392, %v396
        %v401 = vand.u32 2147483647, %v391
        %vm402 = vcmp.eq.f32.partialorder %v401, 8.507059e+37
        %v403 = vand.u32 %v391, 2147483648
        %v404 = vor.u32 1.1754944e-38, %v403
        %v405 = vsel %vm402, %v404, %v400
        %v406 = vmul.f32 1.0, %v405
        %408 = vset.pattern.permute.xlu0 0
        %409 = vperm.xlu0 %408, %v406
        %v410 = vpop.permute.xlu0 %409
        %v412 = vmul.f32 %v292, %v410
        %v413 = vmul.f32 %v293, %v410
        %v414 = vrot.slane %v412, 4
        %v415 = vmax.f32 %v412, %v414
        %v416 = vrot.slane %v415, 2
        %v417 = vmax.f32 %v415, %v416
        %v418 = vrot.slane %v417, 1
        %v419 = vmax.f32 %v417, %v418
        %v420 = vrot.slane %v413, 4
        %v421 = vmax.f32 %v413, %v420
        %v422 = vrot.slane %v421, 2
        %v423 = vmax.f32 %v421, %v422
        %v424 = vrot.slane %v423, 1
        %v425 = vmax.f32 %v423, %v424
        %v426 = vrot.slane %v412, 4
        %v427 = vadd.f32 %v412, %v426
        %v428 = vrot.slane %v427, 2
        %v429 = vadd.f32 %v427, %v428
        %v430 = vrot.slane %v429, 1
        %v431 = vadd.f32 %v429, %v430
        %v432 = vrot.slane %v413, 4
        %v433 = vadd.f32 %v413, %v432
        %v434 = vrot.slane %v433, 2
        %v435 = vadd.f32 %v433, %v434
        %v436 = vrot.slane %v435, 1
        %v437 = vadd.f32 %v435, %v436
        %v438 = vmul.f32 %v431, 0.125
        %v439 = vmul.f32 %v437, 0.125
        %440 = vset.pattern.permute.xlu0 2
        %441 = vperm.xlu0 %440, %v406
        %v442 = vpop.permute.xlu0 %441
        %v444 = vmul.f32 %v294, %v442
        %v445 = vmul.f32 %v295, %v442
        %v446 = vrot.slane %v444, 4
        %v447 = vmax.f32 %v444, %v446
        %v448 = vrot.slane %v447, 2
        %v449 = vmax.f32 %v447, %v448
        %v450 = vrot.slane %v449, 1
        %v451 = vmax.f32 %v449, %v450
        %v452 = vrot.slane %v445, 4
        %v453 = vmax.f32 %v445, %v452
        %v454 = vrot.slane %v453, 2
        %v455 = vmax.f32 %v453, %v454
        %v456 = vrot.slane %v455, 1
        %v457 = vmax.f32 %v455, %v456
        %v458 = vrot.slane %v444, 4
        %v459 = vadd.f32 %v444, %v458
        %v460 = vrot.slane %v459, 2
        %v461 = vadd.f32 %v459, %v460
        %v462 = vrot.slane %v461, 1
        %v463 = vadd.f32 %v461, %v462
        %v464 = vrot.slane %v445, 4
        %v465 = vadd.f32 %v445, %v464
        %v466 = vrot.slane %v465, 2
        %v467 = vadd.f32 %v465, %v466
        %v468 = vrot.slane %v467, 1
        %v469 = vadd.f32 %v467, %v468
        %v470 = vmul.f32 %v463, 0.125
        %v471 = vmul.f32 %v469, 0.125
        %vm472 = vcmask 1040384
        %v473 = vsel %vm472, %v419, %v451
        %v474 = vsel %vm472, %v425, %v457
        %vm475 = vcmask 1041408
        %v476 = vsel %vm475, %v473, %v438
        %v477 = vsel %vm475, %v474, %v439
        %vm478 = vcmask 1042432
        %v479 = vsel %vm478, %v476, %v470
        %v480 = vsel %vm478, %v477, %v471
        %481 = vrot.lane.b32.xlu0 %v479, 51
        %v482 = vpop.permute.xlu0 %481
        %483 = vrot.lane.b32.xlu0 %v480, 51
        %v484 = vpop.permute.xlu0 %483
        %v485 = vlaneseq
        %v486 = vand.u32 %v485, 127
        %vm487 = vcmp.lt.s32.totalorder %v486, 51
        %v488 = vsel %vm487, %v482, %v484
        %v489 = vsel %vm487, %v484, %v482
        %v490 = vld [vmem:[#allocation5] sm:$0xff]
        %v493 = vrot.slane %v488, 4
        %v494 = vsel %vm359, %v489, %v493
        %v496 = vmul.f32 %v490, %v494
        %v497 = vadd.f32 %v496, 0.0
        %498 = vrot.lane.b32.xlu0 %v479, 50
        %v499 = vpop.permute.xlu0 %498
        %500 = vrot.lane.b32.xlu0 %v480, 50
        %v501 = vpop.permute.xlu0 %500
        %vm502 = vcmp.lt.s32.totalorder %v486, 50
        %v503 = vsel %vm502, %v499, %v501
        %v504 = vsel %vm502, %v501, %v499
        %s505 = scalar_lea.vmem [#allocation5], 8
        %v506 = vld [vmem:[%s505] sm:$0xff]
        %v509 = vrot.slane %v503, 4
        %v510 = vsel %vm359, %v504, %v509
        %v512 = vmul.f32 %v506, %v510
        %v513 = vadd.f32 %v512, 0.0
        %514 = vrot.lane.b32.xlu0 %v479, 49
        %v515 = vpop.permute.xlu0 %514
        %516 = vrot.lane.b32.xlu0 %v480, 49
        %v517 = vpop.permute.xlu0 %516
        %vm518 = vcmp.lt.s32.totalorder %v486, 49
        %v519 = vsel %vm518, %v515, %v517
        %v520 = vsel %vm518, %v517, %v515
        %s521 = scalar_lea.vmem [#allocation5], 16
        %v522 = vld [vmem:[%s521] sm:$0xff]
        %v525 = vrot.slane %v519, 4
        %v526 = vsel %vm359, %v520, %v525
        %v528 = vmul.f32 %v522, %v526
        %v529 = vadd.f32 %v497, %v528
        %530 = vrot.lane.b32.xlu0 %v479, 48
        %v531 = vpop.permute.xlu0 %530
        %532 = vrot.lane.b32.xlu0 %v480, 48
        %v533 = vpop.permute.xlu0 %532
        %vm534 = vcmp.lt.s32.totalorder %v486, 48
        %v535 = vsel %vm534, %v531, %v533
        %v536 = vsel %vm534, %v533, %v531
        %s537 = scalar_lea.vmem [#allocation5], 24
        %v538 = vld [vmem:[%s537] sm:$0xff]
        %v541 = vrot.slane %v535, 4
        %v542 = vsel %vm359, %v536, %v541
        %v544 = vmul.f32 %v538, %v542
        %v545 = vadd.f32 %v513, %v544
        %546 = vrot.lane.b32.xlu0 %v479, 47
        %v547 = vpop.permute.xlu0 %546
        %548 = vrot.lane.b32.xlu0 %v480, 47
        %v549 = vpop.permute.xlu0 %548
        %vm550 = vcmp.lt.s32.totalorder %v486, 47
        %v551 = vsel %vm550, %v547, %v549
        %v552 = vsel %vm550, %v549, %v547
        %s553 = scalar_lea.vmem [#allocation5], 32
        %v554 = vld [vmem:[%s553] sm:$0xff]
        %v557 = vrot.slane %v551, 4
        %v558 = vsel %vm359, %v552, %v557
        %v560 = vmul.f32 %v554, %v558
        %v561 = vadd.f32 %v529, %v560
        %562 = vrot.lane.b32.xlu0 %v479, 46
        %v563 = vpop.permute.xlu0 %562
        %564 = vrot.lane.b32.xlu0 %v480, 46
        %v565 = vpop.permute.xlu0 %564
        %vm566 = vcmp.lt.s32.totalorder %v486, 46
        %v567 = vsel %vm566, %v563, %v565
        %v568 = vsel %vm566, %v565, %v563
        %s569 = scalar_lea.vmem [#allocation5], 40
        %v570 = vld [vmem:[%s569] sm:$0xff]
        %v573 = vrot.slane %v567, 4
        %v574 = vsel %vm359, %v568, %v573
        %v576 = vmul.f32 %v570, %v574
        %v577 = vadd.f32 %v545, %v576
        %578 = vrot.lane.b32.xlu0 %v479, 45
        %v579 = vpop.permute.xlu0 %578
        %580 = vrot.lane.b32.xlu0 %v480, 45
        %v581 = vpop.permute.xlu0 %580
        %vm582 = vcmp.lt.s32.totalorder %v486, 45
        %v583 = vsel %vm582, %v579, %v581
        %v584 = vsel %vm582, %v581, %v579
        %s585 = scalar_lea.vmem [#allocation5], 48
        %v586 = vld [vmem:[%s585] sm:$0xff]
        %v589 = vrot.slane %v583, 4
        %v590 = vsel %vm359, %v584, %v589
        %v592 = vmul.f32 %v586, %v590
        %v593 = vadd.f32 %v561, %v592
        %594 = vrot.lane.b32.xlu0 %v479, 35
        %v595 = vpop.permute.xlu0 %594
        %596 = vrot.lane.b32.xlu0 %v480, 35
        %v597 = vpop.permute.xlu0 %596
        %vm598 = vcmp.lt.s32.totalorder %v486, 35
        %v599 = vsel %vm598, %v595, %v597
        %v600 = vsel %vm598, %v597, %v595
        %s601 = scalar_lea.vmem [#allocation5], 56
        %v602 = vld [vmem:[%s601] sm:$0xff]
        %v605 = vrot.slane %v599, 4
        %v606 = vsel %vm359, %v600, %v605
        %v608 = vmul.f32 %v602, %v606
        %v609 = vadd.f32 %v577, %v608
        %610 = vrot.lane.b32.xlu0 %v479, 34
        %v611 = vpop.permute.xlu0 %610
        %612 = vrot.lane.b32.xlu0 %v480, 34
        %v613 = vpop.permute.xlu0 %612
        %vm614 = vcmp.lt.s32.totalorder %v486, 34
        %v615 = vsel %vm614, %v611, %v613
        %v616 = vsel %vm614, %v613, %v611
        %s617 = scalar_lea.vmem [#allocation5], 64
        %v618 = vld [vmem:[%s617] sm:$0xff]
        %v621 = vrot.slane %v615, 4
        %v622 = vsel %vm359, %v616, %v621
        %v624 = vmul.f32 %v618, %v622
        %v625 = vadd.f32 %v593, %v624
        %626 = vrot.lane.b32.xlu0 %v479, 33
        %v627 = vpop.permute.xlu0 %626
        %628 = vrot.lane.b32.xlu0 %v480, 33
        %v629 = vpop.permute.xlu0 %628
        %vm630 = vcmp.lt.s32.totalorder %v486, 33
        %v631 = vsel %vm630, %v627, %v629
        %v632 = vsel %vm630, %v629, %v627
        %s633 = scalar_lea.vmem [#allocation5], 72
        %v634 = vld [vmem:[%s633] sm:$0xff]
        %v637 = vrot.slane %v631, 4
        %v638 = vsel %vm359, %v632, %v637
        %v640 = vmul.f32 %v634, %v638
        %v641 = vadd.f32 %v609, %v640
        %642 = vrot.lane.b32.xlu0 %v479, 32
        %v643 = vpop.permute.xlu0 %642
        %644 = vrot.lane.b32.xlu0 %v480, 32
        %v645 = vpop.permute.xlu0 %644
        %vm646 = vcmp.lt.s32.totalorder %v486, 32
        %v647 = vsel %vm646, %v643, %v645
        %v648 = vsel %vm646, %v645, %v643
        %s649 = scalar_lea.vmem [#allocation5], 80
        %v650 = vld [vmem:[%s649] sm:$0xff]
        %v653 = vrot.slane %v647, 4
        %v654 = vsel %vm359, %v648, %v653
        %v656 = vmul.f32 %v650, %v654
        %v657 = vadd.f32 %v625, %v656
        %658 = vrot.lane.b32.xlu0 %v479, 31
        %v659 = vpop.permute.xlu0 %658
        %660 = vrot.lane.b32.xlu0 %v480, 31
        %v661 = vpop.permute.xlu0 %660
        %vm662 = vcmp.lt.s32.totalorder %v486, 31
        %v663 = vsel %vm662, %v659, %v661
        %v664 = vsel %vm662, %v661, %v659
        %s665 = scalar_lea.vmem [#allocation5], 88
        %v666 = vld [vmem:[%s665] sm:$0xff]
        %v669 = vrot.slane %v663, 4
        %v670 = vsel %vm359, %v664, %v669
        %v672 = vmul.f32 %v666, %v670
        %v673 = vadd.f32 %v641, %v672
        %674 = vrot.lane.b32.xlu0 %v479, 30
        %v675 = vpop.permute.xlu0 %674
        %676 = vrot.lane.b32.xlu0 %v480, 30
        %v677 = vpop.permute.xlu0 %676
        %vm678 = vcmp.lt.s32.totalorder %v486, 30
        %v679 = vsel %vm678, %v675, %v677
        %v680 = vsel %vm678, %v677, %v675
        %s681 = scalar_lea.vmem [#allocation5], 96
        %v682 = vld [vmem:[%s681] sm:$0xff]
        %v685 = vrot.slane %v679, 4
        %v686 = vsel %vm359, %v680, %v685
        %v688 = vmul.f32 %v682, %v686
        %v689 = vadd.f32 %v657, %v688
        %690 = vrot.lane.b32.xlu0 %v479, 29
        %v691 = vpop.permute.xlu0 %690
        %692 = vrot.lane.b32.xlu0 %v480, 29
        %v693 = vpop.permute.xlu0 %692
        %vm694 = vcmp.lt.s32.totalorder %v486, 29
        %v695 = vsel %vm694, %v691, %v693
        %v696 = vsel %vm694, %v693, %v691
        %s697 = scalar_lea.vmem [#allocation5], 104
        %v698 = vld [vmem:[%s697] sm:$0xff]
        %v701 = vrot.slane %v695, 4
        %v702 = vsel %vm359, %v696, %v701
        %v704 = vmul.f32 %v698, %v702
        %v705 = vadd.f32 %v673, %v704
        %706 = vrot.lane.b32.xlu0 %v479, 19
        %v707 = vpop.permute.xlu0 %706
        %708 = vrot.lane.b32.xlu0 %v480, 19
        %v709 = vpop.permute.xlu0 %708
        %vm710 = vcmp.lt.s32.totalorder %v486, 19
        %v711 = vsel %vm710, %v707, %v709
        %v712 = vsel %vm710, %v709, %v707
        %s713 = scalar_lea.vmem [#allocation5], 112
        %v714 = vld [vmem:[%s713] sm:$0xff]
        %v717 = vrot.slane %v711, 4
        %v718 = vsel %vm359, %v712, %v717
        %v720 = vmul.f32 %v714, %v718
        %v721 = vadd.f32 %v689, %v720
        %722 = vrot.lane.b32.xlu0 %v479, 18
        %v723 = vpop.permute.xlu0 %722
        %724 = vrot.lane.b32.xlu0 %v480, 18
        %v725 = vpop.permute.xlu0 %724
        %vm726 = vcmp.lt.s32.totalorder %v486, 18
        %v727 = vsel %vm726, %v723, %v725
        %v728 = vsel %vm726, %v725, %v723
        %s729 = scalar_lea.vmem [#allocation5], 120
        %v730 = vld [vmem:[%s729] sm:$0xff]
        %v733 = vrot.slane %v727, 4
        %v734 = vsel %vm359, %v728, %v733
        %v736 = vmul.f32 %v730, %v734
        %v737 = vadd.f32 %v705, %v736
        %738 = vrot.lane.b32.xlu0 %v479, 17
        %v739 = vpop.permute.xlu0 %738
        %740 = vrot.lane.b32.xlu0 %v480, 17
        %v741 = vpop.permute.xlu0 %740
        %vm742 = vcmp.lt.s32.totalorder %v486, 17
        %v743 = vsel %vm742, %v739, %v741
        %v744 = vsel %vm742, %v741, %v739
        %s745 = scalar_lea.vmem [#allocation5], 128
        %v746 = vld [vmem:[%s745] sm:$0xff]
        %v749 = vrot.slane %v743, 4
        %v750 = vsel %vm359, %v744, %v749
        %v752 = vmul.f32 %v746, %v750
        %v753 = vadd.f32 %v721, %v752
        %754 = vrot.lane.b32.xlu0 %v479, 16
        %v755 = vpop.permute.xlu0 %754
        %756 = vrot.lane.b32.xlu0 %v480, 16
        %v757 = vpop.permute.xlu0 %756
        %vm758 = vcmp.lt.s32.totalorder %v486, 16
        %v759 = vsel %vm758, %v755, %v757
        %v760 = vsel %vm758, %v757, %v755
        %s761 = scalar_lea.vmem [#allocation5], 136
        %v762 = vld [vmem:[%s761] sm:$0xff]
        %v765 = vrot.slane %v759, 4
        %v766 = vsel %vm359, %v760, %v765
        %v768 = vmul.f32 %v762, %v766
        %v769 = vadd.f32 %v737, %v768
        %770 = vrot.lane.b32.xlu0 %v479, 15
        %v771 = vpop.permute.xlu0 %770
        %772 = vrot.lane.b32.xlu0 %v480, 15
        %v773 = vpop.permute.xlu0 %772
        %vm774 = vcmp.lt.s32.totalorder %v486, 15
        %v775 = vsel %vm774, %v771, %v773
        %v776 = vsel %vm774, %v773, %v771
        %s777 = scalar_lea.vmem [#allocation5], 144
        %v778 = vld [vmem:[%s777] sm:$0xff]
        %v781 = vrot.slane %v775, 4
        %v782 = vsel %vm359, %v776, %v781
        %v784 = vmul.f32 %v778, %v782
        %v785 = vadd.f32 %v753, %v784
        %786 = vrot.lane.b32.xlu0 %v479, 14
        %v787 = vpop.permute.xlu0 %786
        %788 = vrot.lane.b32.xlu0 %v480, 14
        %v789 = vpop.permute.xlu0 %788
        %vm790 = vcmp.lt.s32.totalorder %v486, 14
        %v791 = vsel %vm790, %v787, %v789
        %v792 = vsel %vm790, %v789, %v787
        %s793 = scalar_lea.vmem [#allocation5], 152
        %v794 = vld [vmem:[%s793] sm:$0xff]
        %v797 = vrot.slane %v791, 4
        %v798 = vsel %vm359, %v792, %v797
        %v800 = vmul.f32 %v794, %v798
        %v801 = vadd.f32 %v769, %v800
        %802 = vrot.lane.b32.xlu0 %v479, 13
        %v803 = vpop.permute.xlu0 %802
        %804 = vrot.lane.b32.xlu0 %v480, 13
        %v805 = vpop.permute.xlu0 %804
        %vm806 = vcmp.lt.s32.totalorder %v486, 13
        %v807 = vsel %vm806, %v803, %v805
        %v808 = vsel %vm806, %v805, %v803
        %s809 = scalar_lea.vmem [#allocation5], 160
        %v810 = vld [vmem:[%s809] sm:$0xff]
        %v813 = vrot.slane %v807, 4
        %v814 = vsel %vm359, %v808, %v813
        %v816 = vmul.f32 %v810, %v814
        %v817 = vadd.f32 %v785, %v816
        %818 = vrot.lane.b32.xlu0 %v479, 3
        %v819 = vpop.permute.xlu0 %818
        %820 = vrot.lane.b32.xlu0 %v480, 3
        %v821 = vpop.permute.xlu0 %820
        %vm822 = vcmp.lt.s32.totalorder %v486, 3
        %v823 = vsel %vm822, %v819, %v821
        %v824 = vsel %vm822, %v821, %v819
        %s825 = scalar_lea.vmem [#allocation5], 168
        %v826 = vld [vmem:[%s825] sm:$0xff]
        %v829 = vrot.slane %v823, 4
        %v830 = vsel %vm359, %v824, %v829
        %v832 = vmul.f32 %v826, %v830
        %v833 = vadd.f32 %v801, %v832
        %834 = vrot.lane.b32.xlu0 %v479, 2
        %v835 = vpop.permute.xlu0 %834
        %836 = vrot.lane.b32.xlu0 %v480, 2
        %v837 = vpop.permute.xlu0 %836
        %vm838 = vcmp.lt.s32.totalorder %v486, 2
        %v839 = vsel %vm838, %v835, %v837
        %v840 = vsel %vm838, %v837, %v835
        %s841 = scalar_lea.vmem [#allocation5], 176
        %v842 = vld [vmem:[%s841] sm:$0xff]
        %v845 = vrot.slane %v839, 4
        %v846 = vsel %vm359, %v840, %v845
        %v848 = vmul.f32 %v842, %v846
        %v849 = vadd.f32 %v817, %v848
        %850 = vrot.lane.b32.xlu0 %v479, 1
        %v851 = vpop.permute.xlu0 %850
        %852 = vrot.lane.b32.xlu0 %v480, 1
        %v853 = vpop.permute.xlu0 %852
        %vm854 = vcmp.lt.s32.totalorder %v486, 1
        %v855 = vsel %vm854, %v851, %v853
        %v856 = vsel %vm854, %v853, %v851
        %s857 = scalar_lea.vmem [#allocation5], 184
        %v858 = vld [vmem:[%s857] sm:$0xff]
        %v861 = vrot.slane %v855, 4
        %v862 = vsel %vm359, %v856, %v861
        %v864 = vmul.f32 %v858, %v862
        %v865 = vadd.f32 %v833, %v864
        %s866 = scalar_lea.vmem [#allocation5], 192
        %v867 = vld [vmem:[%s866] sm:$0xff]
        %v870 = vrot.slane %v480, 4
        %v871 = vsel %vm359, %v479, %v870
        %v873 = vmul.f32 %v867, %v871
        %v874 = vadd.f32 %v849, %v873
        %875 = vrot.lane.b32.xlu0 %v479, 127
        %v876 = vpop.permute.xlu0 %875
        %877 = vrot.lane.b32.xlu0 %v480, 127
        %v878 = vpop.permute.xlu0 %877
        %vm879 = vcmp.lt.s32.totalorder %v486, 127
        %v880 = vsel %vm879, %v876, %v878
        %v881 = vsel %vm879, %v878, %v876
        %s882 = scalar_lea.vmem [#allocation5], 200
        %v883 = vld [vmem:[%s882] sm:$0xff]
        %v886 = vrot.slane %v881, 4
        %v887 = vsel %vm359, %v880, %v886
        %v889 = vmul.f32 %v883, %v887
        %v890 = vadd.f32 %v865, %v889
        %891 = vrot.lane.b32.xlu0 %v479, 126
        %v892 = vpop.permute.xlu0 %891
        %893 = vrot.lane.b32.xlu0 %v480, 126
        %v894 = vpop.permute.xlu0 %893
        %vm895 = vcmp.lt.s32.totalorder %v486, 126
        %v896 = vsel %vm895, %v892, %v894
        %v897 = vsel %vm895, %v894, %v892
        %s898 = scalar_lea.vmem [#allocation5], 208
        %v899 = vld [vmem:[%s898] sm:$0xff]
        %v902 = vrot.slane %v897, 4
        %v903 = vsel %vm359, %v896, %v902
        %v905 = vmul.f32 %v899, %v903
        %v906 = vadd.f32 %v874, %v905
        %907 = vrot.lane.b32.xlu0 %v479, 125
        %v908 = vpop.permute.xlu0 %907
        %909 = vrot.lane.b32.xlu0 %v480, 125
        %v910 = vpop.permute.xlu0 %909
        %vm911 = vcmp.lt.s32.totalorder %v486, 125
        %v912 = vsel %vm911, %v908, %v910
        %v913 = vsel %vm911, %v910, %v908
        %s914 = scalar_lea.vmem [#allocation5], 216
        %v915 = vld [vmem:[%s914] sm:$0xff]
        %v918 = vrot.slane %v913, 4
        %v919 = vsel %vm359, %v912, %v918
        %v921 = vmul.f32 %v915, %v919
        %v922 = vadd.f32 %v890, %v921
        %923 = vrot.lane.b32.xlu0 %v479, 115
        %v924 = vpop.permute.xlu0 %923
        %925 = vrot.lane.b32.xlu0 %v480, 115
        %v926 = vpop.permute.xlu0 %925
        %vm927 = vcmp.lt.s32.totalorder %v486, 115
        %v928 = vsel %vm927, %v924, %v926
        %v929 = vsel %vm927, %v926, %v924
        %s930 = scalar_lea.vmem [#allocation5], 224
        %v931 = vld [vmem:[%s930] sm:$0xff]
        %v934 = vrot.slane %v929, 4
        %v935 = vsel %vm359, %v928, %v934
        %v937 = vmul.f32 %v931, %v935
        %v938 = vadd.f32 %v906, %v937
        %939 = vrot.lane.b32.xlu0 %v479, 114
        %v940 = vpop.permute.xlu0 %939
        %941 = vrot.lane.b32.xlu0 %v480, 114
        %v942 = vpop.permute.xlu0 %941
        %vm943 = vcmp.lt.s32.totalorder %v486, 114
        %v944 = vsel %vm943, %v940, %v942
        %v945 = vsel %vm943, %v942, %v940
        %s946 = scalar_lea.vmem [#allocation5], 232
        %v947 = vld [vmem:[%s946] sm:$0xff]
        %v950 = vrot.slane %v945, 4
        %v951 = vsel %vm359, %v944, %v950
        %v953 = vmul.f32 %v947, %v951
        %v954 = vadd.f32 %v922, %v953
        %955 = vrot.lane.b32.xlu0 %v479, 113
        %v956 = vpop.permute.xlu0 %955
        %957 = vrot.lane.b32.xlu0 %v480, 113
        %v958 = vpop.permute.xlu0 %957
        %vm959 = vcmp.lt.s32.totalorder %v486, 113
        %v960 = vsel %vm959, %v956, %v958
        %v961 = vsel %vm959, %v958, %v956
        %s962 = scalar_lea.vmem [#allocation5], 240
        %v963 = vld [vmem:[%s962] sm:$0xff]
        %v966 = vrot.slane %v961, 4
        %v967 = vsel %vm359, %v960, %v966
        %v969 = vmul.f32 %v963, %v967
        %v970 = vadd.f32 %v938, %v969
        %971 = vrot.lane.b32.xlu0 %v479, 112
        %v972 = vpop.permute.xlu0 %971
        %973 = vrot.lane.b32.xlu0 %v480, 112
        %v974 = vpop.permute.xlu0 %973
        %vm975 = vcmp.lt.s32.totalorder %v486, 112
        %v976 = vsel %vm975, %v972, %v974
        %v977 = vsel %vm975, %v974, %v972
        %s978 = scalar_lea.vmem [#allocation5], 248
        %v979 = vld [vmem:[%s978] sm:$0xff]
        %v982 = vrot.slane %v977, 4
        %v983 = vsel %vm359, %v976, %v982
        %v985 = vmul.f32 %v979, %v983
        %v986 = vadd.f32 %v954, %v985
        %987 = vrot.lane.b32.xlu0 %v479, 111
        %v988 = vpop.permute.xlu0 %987
        %989 = vrot.lane.b32.xlu0 %v480, 111
        %v990 = vpop.permute.xlu0 %989
        %vm991 = vcmp.lt.s32.totalorder %v486, 111
        %v992 = vsel %vm991, %v988, %v990
        %v993 = vsel %vm991, %v990, %v988
        %s994 = scalar_lea.vmem [#allocation5], 256
        %v995 = vld [vmem:[%s994] sm:$0xff]
        %v998 = vrot.slane %v993, 4
        %v999 = vsel %vm359, %v992, %v998
        %v1001 = vmul.f32 %v995, %v999
        %v1002 = vadd.f32 %v970, %v1001
        %1003 = vrot.lane.b32.xlu0 %v479, 110
        %v1004 = vpop.permute.xlu0 %1003
        %1005 = vrot.lane.b32.xlu0 %v480, 110
        %v1006 = vpop.permute.xlu0 %1005
        %vm1007 = vcmp.lt.s32.totalorder %v486, 110
        %v1008 = vsel %vm1007, %v1004, %v1006
        %v1009 = vsel %vm1007, %v1006, %v1004
        %s1010 = scalar_lea.vmem [#allocation5], 264
        %v1011 = vld [vmem:[%s1010] sm:$0xff]
        %v1014 = vrot.slane %v1009, 4
        %v1015 = vsel %vm359, %v1008, %v1014
        %v1017 = vmul.f32 %v1011, %v1015
        %v1018 = vadd.f32 %v986, %v1017
        %1019 = vrot.lane.b32.xlu0 %v479, 109
        %v1020 = vpop.permute.xlu0 %1019
        %1021 = vrot.lane.b32.xlu0 %v480, 109
        %v1022 = vpop.permute.xlu0 %1021
        %vm1023 = vcmp.lt.s32.totalorder %v486, 109
        %v1024 = vsel %vm1023, %v1020, %v1022
        %v1025 = vsel %vm1023, %v1022, %v1020
        %s1026 = scalar_lea.vmem [#allocation5], 272
        %v1027 = vld [vmem:[%s1026] sm:$0xff]
        %v1030 = vrot.slane %v1025, 4
        %v1031 = vsel %vm359, %v1024, %v1030
        %v1033 = vmul.f32 %v1027, %v1031
        %v1034 = vadd.f32 %v1002, %v1033
        %1035 = vrot.lane.b32.xlu0 %v479, 99
        %v1036 = vpop.permute.xlu0 %1035
        %1037 = vrot.lane.b32.xlu0 %v480, 99
        %v1038 = vpop.permute.xlu0 %1037
        %vm1039 = vcmp.lt.s32.totalorder %v486, 99
        %v1040 = vsel %vm1039, %v1036, %v1038
        %v1041 = vsel %vm1039, %v1038, %v1036
        %s1042 = scalar_lea.vmem [#allocation5], 280
        %v1043 = vld [vmem:[%s1042] sm:$0xff]
        %v1046 = vrot.slane %v1041, 4
        %v1047 = vsel %vm359, %v1040, %v1046
        %v1049 = vmul.f32 %v1043, %v1047
        %v1050 = vadd.f32 %v1018, %v1049
        %1051 = vrot.lane.b32.xlu0 %v479, 98
        %v1052 = vpop.permute.xlu0 %1051
        %1053 = vrot.lane.b32.xlu0 %v480, 98
        %v1054 = vpop.permute.xlu0 %1053
        %vm1055 = vcmp.lt.s32.totalorder %v486, 98
        %v1056 = vsel %vm1055, %v1052, %v1054
        %v1057 = vsel %vm1055, %v1054, %v1052
        %s1058 = scalar_lea.vmem [#allocation5], 288
        %v1059 = vld [vmem:[%s1058] sm:$0xff]
        %v1062 = vrot.slane %v1057, 4
        %v1063 = vsel %vm359, %v1056, %v1062
        %v1065 = vmul.f32 %v1059, %v1063
        %v1066 = vadd.f32 %v1034, %v1065
        %1067 = vrot.lane.b32.xlu0 %v479, 97
        %v1068 = vpop.permute.xlu0 %1067
        %1069 = vrot.lane.b32.xlu0 %v480, 97
        %v1070 = vpop.permute.xlu0 %1069
        %vm1071 = vcmp.lt.s32.totalorder %v486, 97
        %v1072 = vsel %vm1071, %v1068, %v1070
        %v1073 = vsel %vm1071, %v1070, %v1068
        %s1074 = scalar_lea.vmem [#allocation5], 296
        %v1075 = vld [vmem:[%s1074] sm:$0xff]
        %v1078 = vrot.slane %v1073, 4
        %v1079 = vsel %vm359, %v1072, %v1078
        %v1081 = vmul.f32 %v1075, %v1079
        %v1082 = vadd.f32 %v1050, %v1081
        %1083 = vrot.lane.b32.xlu0 %v479, 96
        %v1084 = vpop.permute.xlu0 %1083
        %1085 = vrot.lane.b32.xlu0 %v480, 96
        %v1086 = vpop.permute.xlu0 %1085
        %vm1087 = vcmp.lt.s32.totalorder %v486, 96
        %v1088 = vsel %vm1087, %v1084, %v1086
        %v1089 = vsel %vm1087, %v1086, %v1084
        %s1090 = scalar_lea.vmem [#allocation5], 304
        %v1091 = vld [vmem:[%s1090] sm:$0xff]
        %v1094 = vrot.slane %v1089, 4
        %v1095 = vsel %vm359, %v1088, %v1094
        %v1097 = vmul.f32 %v1091, %v1095
        %v1098 = vadd.f32 %v1066, %v1097
        %1099 = vrot.lane.b32.xlu0 %v479, 95
        %v1100 = vpop.permute.xlu0 %1099
        %1101 = vrot.lane.b32.xlu0 %v480, 95
        %v1102 = vpop.permute.xlu0 %1101
        %vm1103 = vcmp.lt.s32.totalorder %v486, 95
        %v1104 = vsel %vm1103, %v1100, %v1102
        %v1105 = vsel %vm1103, %v1102, %v1100
        %s1106 = scalar_lea.vmem [#allocation5], 312
        %v1107 = vld [vmem:[%s1106] sm:$0xff]
        %v1110 = vrot.slane %v1105, 4
        %v1111 = vsel %vm359, %v1104, %v1110
        %v1113 = vmul.f32 %v1107, %v1111
        %v1114 = vadd.f32 %v1082, %v1113
        %1115 = vrot.lane.b32.xlu0 %v479, 94
        %v1116 = vpop.permute.xlu0 %1115
        %1117 = vrot.lane.b32.xlu0 %v480, 94
        %v1118 = vpop.permute.xlu0 %1117
        %vm1119 = vcmp.lt.s32.totalorder %v486, 94
        %v1120 = vsel %vm1119, %v1116, %v1118
        %v1121 = vsel %vm1119, %v1118, %v1116
        %s1122 = scalar_lea.vmem [#allocation5], 320
        %v1123 = vld [vmem:[%s1122] sm:$0xff]
        %v1126 = vrot.slane %v1121, 4
        %v1127 = vsel %vm359, %v1120, %v1126
        %v1129 = vmul.f32 %v1123, %v1127
        %v1130 = vadd.f32 %v1098, %v1129
        %1131 = vrot.lane.b32.xlu0 %v479, 93
        %v1132 = vpop.permute.xlu0 %1131
        %1133 = vrot.lane.b32.xlu0 %v480, 93
        %v1134 = vpop.permute.xlu0 %1133
        %vm1135 = vcmp.lt.s32.totalorder %v486, 93
        %v1136 = vsel %vm1135, %v1132, %v1134
        %v1137 = vsel %vm1135, %v1134, %v1132
        %s1138 = scalar_lea.vmem [#allocation5], 328
        %v1139 = vld [vmem:[%s1138] sm:$0xff]
        %v1142 = vrot.slane %v1137, 4
        %v1143 = vsel %vm359, %v1136, %v1142
        %v1145 = vmul.f32 %v1139, %v1143
        %v1146 = vadd.f32 %v1114, %v1145
        %1147 = vrot.lane.b32.xlu0 %v479, 83
        %v1148 = vpop.permute.xlu0 %1147
        %1149 = vrot.lane.b32.xlu0 %v480, 83
        %v1150 = vpop.permute.xlu0 %1149
        %vm1151 = vcmp.lt.s32.totalorder %v486, 83
        %v1152 = vsel %vm1151, %v1148, %v1150
        %v1153 = vsel %vm1151, %v1150, %v1148
        %s1154 = scalar_lea.vmem [#allocation5], 336
        %v1155 = vld [vmem:[%s1154] sm:$0xff]
        %v1158 = vrot.slane %v1153, 4
        %v1159 = vsel %vm359, %v1152, %v1158
        %v1161 = vmul.f32 %v1155, %v1159
        %v1162 = vadd.f32 %v1130, %v1161
        %1163 = vrot.lane.b32.xlu0 %v479, 82
        %v1164 = vpop.permute.xlu0 %1163
        %1165 = vrot.lane.b32.xlu0 %v480, 82
        %v1166 = vpop.permute.xlu0 %1165
        %vm1167 = vcmp.lt.s32.totalorder %v486, 82
        %v1168 = vsel %vm1167, %v1164, %v1166
        %v1169 = vsel %vm1167, %v1166, %v1164
        %s1170 = scalar_lea.vmem [#allocation5], 344
        %v1171 = vld [vmem:[%s1170] sm:$0xff]
        %v1174 = vrot.slane %v1169, 4
        %v1175 = vsel %vm359, %v1168, %v1174
        %v1177 = vmul.f32 %v1171, %v1175
        %v1178 = vadd.f32 %v1146, %v1177
        %1179 = vrot.lane.b32.xlu0 %v479, 81
        %v1180 = vpop.permute.xlu0 %1179
        %1181 = vrot.lane.b32.xlu0 %v480, 81
        %v1182 = vpop.permute.xlu0 %1181
        %vm1183 = vcmp.lt.s32.totalorder %v486, 81
        %v1184 = vsel %vm1183, %v1180, %v1182
        %v1185 = vsel %vm1183, %v1182, %v1180
        %s1186 = scalar_lea.vmem [#allocation5], 352
        %v1187 = vld [vmem:[%s1186] sm:$0xff]
        %v1190 = vrot.slane %v1185, 4
        %v1191 = vsel %vm359, %v1184, %v1190
        %v1193 = vmul.f32 %v1187, %v1191
        %v1194 = vadd.f32 %v1162, %v1193
        %1195 = vrot.lane.b32.xlu0 %v479, 80
        %v1196 = vpop.permute.xlu0 %1195
        %1197 = vrot.lane.b32.xlu0 %v480, 80
        %v1198 = vpop.permute.xlu0 %1197
        %vm1199 = vcmp.lt.s32.totalorder %v486, 80
        %v1200 = vsel %vm1199, %v1196, %v1198
        %v1201 = vsel %vm1199, %v1198, %v1196
        %s1202 = scalar_lea.vmem [#allocation5], 360
        %v1203 = vld [vmem:[%s1202] sm:$0xff]
        %v1206 = vrot.slane %v1201, 4
        %v1207 = vsel %vm359, %v1200, %v1206
        %v1209 = vmul.f32 %v1203, %v1207
        %v1210 = vadd.f32 %v1178, %v1209
        %1211 = vrot.lane.b32.xlu0 %v479, 79
        %v1212 = vpop.permute.xlu0 %1211
        %1213 = vrot.lane.b32.xlu0 %v480, 79
        %v1214 = vpop.permute.xlu0 %1213
        %vm1215 = vcmp.lt.s32.totalorder %v486, 79
        %v1216 = vsel %vm1215, %v1212, %v1214
        %v1217 = vsel %vm1215, %v1214, %v1212
        %s1218 = scalar_lea.vmem [#allocation5], 368
        %v1219 = vld [vmem:[%s1218] sm:$0xff]
        %v1222 = vrot.slane %v1217, 4
        %v1223 = vsel %vm359, %v1216, %v1222
        %v1225 = vmul.f32 %v1219, %v1223
        %v1226 = vadd.f32 %v1194, %v1225
        %1227 = vrot.lane.b32.xlu0 %v479, 78
        %v1228 = vpop.permute.xlu0 %1227
        %1229 = vrot.lane.b32.xlu0 %v480, 78
        %v1230 = vpop.permute.xlu0 %1229
        %vm1231 = vcmp.lt.s32.totalorder %v486, 78
        %v1232 = vsel %vm1231, %v1228, %v1230
        %v1233 = vsel %vm1231, %v1230, %v1228
        %s1234 = scalar_lea.vmem [#allocation5], 376
        %v1235 = vld [vmem:[%s1234] sm:$0xff]
        %v1238 = vrot.slane %v1233, 4
        %v1239 = vsel %vm359, %v1232, %v1238
        %v1241 = vmul.f32 %v1235, %v1239
        %v1242 = vadd.f32 %v1210, %v1241
        %1243 = vrot.lane.b32.xlu0 %v479, 77
        %v1244 = vpop.permute.xlu0 %1243
        %1245 = vrot.lane.b32.xlu0 %v480, 77
        %v1246 = vpop.permute.xlu0 %1245
        %vm1247 = vcmp.lt.s32.totalorder %v486, 77
        %v1248 = vsel %vm1247, %v1244, %v1246
        %v1249 = vsel %vm1247, %v1246, %v1244
        %s1250 = scalar_lea.vmem [#allocation5], 384
        %v1251 = vld [vmem:[%s1250] sm:$0xff]
        %v1254 = vrot.slane %v1249, 4
        %v1255 = vsel %vm359, %v1248, %v1254
        %v1257 = vmul.f32 %v1251, %v1255
        %v1258 = vadd.f32 %v1226, %v1257
        %v1259 = vadd.f32 %v1258, %v1242
        %v1261 = vrot.slane %v1259, 6
        %v1262 = vrot.slane %v1261, 4
        %v1264 = vadd.f32 %v1259, %v1262
        %v1265 = vxor.u32 %v1264, 2147483648
        %v1266 = vmul.f32 %v1265, 1.442695
        %v1267 = vpow.pop %v1266
        %v1268 = vadd.f32 %v1267, 1.0
        %v1269 = vrcp.pop %v1268
        %v1270 = vmul.f32 %v1268, %v1269
        %v1271 = vsub.f32 1.0, %v1270
        %v1272 = vmul.f32 %v1269, %v1271
        %v1273 = vadd.f32 %v1269, %v1272
        %vm1274 = vweird.f32 %v1268
        %vm1275 = vweird.f32 %v1269
        %vm1276 = vmor %vm1274, %vm1275
        %v1277 = vsel %vm1276, %v1269, %v1273
        %v1278 = vand.u32 2147483647, %v1268
        %vm1279 = vcmp.eq.f32.partialorder %v1278, 8.507059e+37
        %v1280 = vand.u32 %v1268, 2147483648
        %v1281 = vor.u32 1.1754944e-38, %v1280
        %v1282 = vsel %vm1279, %v1281, %v1277
        %v1283 = vmul.f32 1.0, %v1282
        %v1285 = vperm.slane %v1283, 0
        %v1286 = vperm.slane %v1283, 4
        %v1289 = vperm.slane %v1285, 0
        %v1290 = vperm.slane %v1286, 0
        %v1291 = vmul.f32 %v1289, %v412
        %v1292 = vmul.f32 %v1290, %v413
        %v1293 = vadd.f32 %v1291, %v292
        %v1294 = vadd.f32 %v1292, %v293
        %1295 = vst [vmem:[%s289] sm:$0xff] %v1293
        %1296 = vst [vmem:[%s289 + $0x8] sm:$0xff] %v1294
        %v1297 = vperm.slane %v1283, 1
        %v1298 = vperm.slane %v1283, 5
        %v1301 = vperm.slane %v1297, 1
        %v1302 = vperm.slane %v1298, 1
        %v1303 = vmul.f32 %v1301, %v444
        %v1304 = vmul.f32 %v1302, %v445
        %v1305 = vadd.f32 %v1303, %v294
        %v1306 = vadd.f32 %v1304, %v295
        %s1307 = scalar_lea.vmem %s289, 16 [#allocation7]
        %1308 = vst [vmem:[%s1307] sm:$0xff] %v1305
        %1309 = vst [vmem:[%s1307 + $0x8] sm:$0xff] %v1306
        %s1310 = sand.u32 %s163, 1
        %s1311 = scalar_lea.sflag [#allocation4], %s1310
        %s1312 = sand.u32 %s163, 1
        %s1313 = smul.addr %s1312, 32
        %s1314 = scalar_lea.vmem [#allocation7], %s1313
        // Predicated region
        $region53: #{tpu_custom_call.1} parent=43 // pred_check
          %p1315 = pneg %p173
        $region54: #{tpu_custom_call.1} parent=43 // pred_check_branch
          %1317 = sbr.rel (%p1315) target = $region56
        $region55: #{tpu_custom_call.1} parent=43 // pred_region
          %s1318 = smul.u32 2, %s24
          %1320 = vsyncadd %s1311, 0
          %s1321 = smul.addr %s1318, 2
          %s1322 = smul.addr %s1321, 8
          %s1323 = scalar_lea.hbm %s6, %s1322
          %s1324 = sshll.u32 %s1314, 4
          %s1325 = int_to_ptr.vmem [resolvable:$true] %s1324
          %s1326 = sshll.u32 %s1323, 4
          %s1327 = int_to_ptr.hbm [resolvable:$true] %s1326
          %1332 = dma.vmem_to_hbm [thread:$0]  %s1325, 512, %s1327, %s1311, 256, 256, 16
        $region56: #{tpu_custom_call.1} parent=43 // pred_fallthru
          _
      $region44: #{tpu_custom_call.1} parent=5 // pred_fallthru
        _
      %p1333 = scmp.le.s32.totalorder 2, %s19
      // Predicated region
      $region57: #{tpu_custom_call.1} parent=5 // pred_check
        %p1334 = pneg %p1333
      $region58: #{tpu_custom_call.1} parent=5 // pred_check_branch
        %1336 = sbr.rel (%p1334) target = $region60
      $region59: #{tpu_custom_call.1} parent=5 // pred_region
        %s1337 = ssub.s32 %s19, 2
        // Predicated region
        $region61: #{tpu_custom_call.1} parent=59 // pred_check
          %p1338 = pneg %p179
        $region62: #{tpu_custom_call.1} parent=59 // pred_check_branch
          %1340 = sbr.rel (%p1338) target = $region64
        $region63: #{tpu_custom_call.1} parent=59 // pred_region
          %s1341 = sand.u32 %s164, 1
          %s1342 = scalar_lea.sflag [#allocation4], %s1341
          %s1343 = sand.u32 %s164, 1
          %s1344 = smul.addr %s1343, 32
          %s1345 = scalar_lea.vmem [#allocation7], %s1344
          %1347 = dma.done %s1342, 512
        $region64: #{tpu_custom_call.1} parent=59 // pred_fallthru
          _
      $region60: #{tpu_custom_call.1} parent=5 // pred_fallthru
        _
    $region6: #{tpu_custom_call.1} parent=1 // loop_footer
      %s23 = sadd.s32 1, %s19
    $region7: #{tpu_custom_call.1} parent=1 // loop_footer_branch
      %18 = sbr.rel target = $region3
    $region8: #{tpu_custom_call.1} parent=1 // loop_exit
      _
    %1348 = vsyncpa [#allocation3], 1
    %s1349 = scalar_lea.sflag [#allocation3], 1
    %1350 = vsyncpa %s1349, 1
    %1351 = vsyncpa [#allocation6], 1
    %1352 = vsyncpa [#allocation4], 1
    %s1353 = scalar_lea.sflag [#allocation4], 1
    %1354 = vsyncpa %s1353, 1

</llo_original>
